<compile_context>
chip_gen: v6e
topology: v6e:2x2x1
jax: 0.10.0
libtpu: 0.0.40
codegen_flags: <defaults>
</compile_context>

<pallas_src>
import math

import jax
import jax.numpy as jnp
from jax import lax
from jax.experimental import pallas as pl
from jax.experimental.pallas import tpu as pltpu


# ---------------------------------------------------------------------------
# Pallas kernel
# ---------------------------------------------------------------------------
def _lstm_cell(gates, c, H):
    """PyTorch-semantics LSTM cell on packed pre-activations (gate order i,f,g,o).

    One transcendental pass per gate element: sigmoid on i/f/o, tanh on g.
    """
    i = jax.nn.sigmoid(gates[:, 0 * H:1 * H])
    f = jax.nn.sigmoid(gates[:, 1 * H:2 * H])
    g = jnp.tanh(gates[:, 2 * H:3 * H])
    o = jax.nn.sigmoid(gates[:, 3 * H:4 * H])
    c_new = f * c + i * g
    h_new = o * jnp.tanh(c_new)
    return h_new, c_new


def decoder_kernel(x_ref, w1i_ref, w1h_ref, b1_ref,
                   w2i_ref, w2h_ref, b2_ref, wd_ref, bd_ref, out_ref):
    B = x_ref.shape[0]
    H1 = w1h_ref.shape[0]          # hidden_dim of rnn1
    NF = wd_ref.shape[0]           # n_features (= hidden of rnn2)
    T = out_ref.shape[1] // NF     # seq_len (static)

    # Time-invariant layer-1 input projection, hoisted out of the recurrence
    # (the torch repeat makes x identical at every time step), biases folded.
    gx1 = (jnp.dot(x_ref[...], w1i_ref[...], preferred_element_type=jnp.float32)
           + b1_ref[...])                                   # (B, 4H1)

    # Hoist all weight/bias reads & broadcasts out of the loop
    # (JAX does not CSE broadcast_in_dim inside loops).
    w1h = w1h_ref[...]                                      # (H1, 4H1)
    w2i = w2i_ref[...]                                      # (H1, 4NF)
    w2h = w2h_ref[...]                                      # (NF, 4NF)
    b2b = jnp.broadcast_to(b2_ref[...], (B, 4 * NF))        # (B, 4NF)
    wd_s = wd_ref[0:1, 0:1]                                 # scalar when NF==1
    wd = wd_ref[...]                                        # (NF, NF)
    bd = bd_ref[...]                                        # (1, NF)

    h1 = jnp.zeros((B, H1), jnp.float32)
    c1 = jnp.zeros((B, H1), jnp.float32)
    h2 = jnp.zeros((B, NF), jnp.float32)
    c2 = jnp.zeros((B, NF), jnp.float32)

    for t in range(T):             # fully unrolled: T is static and small
        # rnn1: exactly one MXU push per step (input projection hoisted).
        g1 = jnp.dot(h1, w1h, preferred_element_type=jnp.float32) + gx1
        h1, c1 = _lstm_cell(g1, c1, H1)

        # rnn2: input term on the MXU; recurrent term is a VPU broadcast-FMA
        # when NF == 1 (no per-step concatenate, no padded fused matmul).
        g2 = jnp.dot(h1, w2i, preferred_element_type=jnp.float32) + b2b
        if NF == 1:
            g2 = g2 + h2 * w2h                              # (B,1)*(1,4) FMA
        else:
            g2 = g2 + jnp.dot(h2, w2h, preferred_element_type=jnp.float32)
        h2, c2 = _lstm_cell(g2, c2, NF)

        # dense fused per step; stream the result straight into the output slab
        # (no T-element live list, no epilogue concatenate, no kron weight).
        if NF == 1:
            y_t = h2 * wd_s + bd                            # scalar FMA on VPU
        else:
            y_t = jnp.dot(h2, wd, preferred_element_type=jnp.float32) + bd
        out_ref[:, t * NF:(t + 1) * NF] = y_t.astype(out_ref.dtype)


# ---------------------------------------------------------------------------
# Parameter init (deterministic, PyTorch-style uniform fan-in init)
# ---------------------------------------------------------------------------
def init_decoder_params(key, input_dim=64, n_features=1):
    hidden_dim = 2 * input_dim
    ks = jax.random.split(key, 10)

    def u(k, shape, bound):
        return jax.random.uniform(k, shape, jnp.float32, -bound, bound)

    k1 = 1.0 / math.sqrt(hidden_dim)
    k2 = 1.0 / math.sqrt(n_features)
    return dict(
        input_dim=input_dim,
        n_features=n_features,
        hidden_dim=hidden_dim,
        # rnn1: LSTM(input_dim -> hidden_dim)
        w1_ih=u(ks[0], (4 * hidden_dim, input_dim), k1),
        w1_hh=u(ks[1], (4 * hidden_dim, hidden_dim), k1),
        b1_ih=u(ks[2], (4 * hidden_dim,), k1),
        b1_hh=u(ks[3], (4 * hidden_dim,), k1),
        # rnn2: LSTM(hidden_dim -> n_features)
        w2_ih=u(ks[4], (4 * n_features, hidden_dim), k2),
        w2_hh=u(ks[5], (4 * n_features, n_features), k2),
        b2_ih=u(ks[6], (4 * n_features,), k2),
        b2_hh=u(ks[7], (4 * n_features,), k2),
        # dense: Linear(n_features -> n_features)
        wd=u(ks[8], (n_features, n_features), k2),
        bd=u(ks[9], (n_features,), k2),
    )


# ---------------------------------------------------------------------------
# Wrapper (torch forward glue + pallas_call)
# ---------------------------------------------------------------------------
def _pick_batch_block(b):
    # Prefer >=2 sublane-aligned blocks (keeps the second v7x TensorCore busy),
    # otherwise the largest aligned block, otherwise the full (tiny) batch.
    for bb in (256, 128, 64, 32, 16, 8):
        if b % bb == 0 and b // bb >= 2:
            return bb
    for bb in (512, 256, 128, 64, 32, 16, 8):
        if b % bb == 0:
            return bb
    return b                       # full dim is always a legal block


def decoder_forward(params, x, seq_len):
    D = params["input_dim"]
    nf = params["n_features"]

    # torch glue: x.repeat(b0, seq_len, 1).reshape((b0*b0, seq_len, D)).
    # Both the batch repeat (b0x) and the time repeat (seq_len x) are pure
    # copies, so the kernel only ever sees the b0 UNIQUE latents; the batch
    # repeat is re-applied to the output below (an HBM-bandwidth copy by XLA).
    b0 = x.shape[0]
    x_lat = x.reshape(b0, D).astype(jnp.float32)                      # (b0, D)

    # Pre-transpose weights; fold the two bias vectors of each LSTM together.
    w1i = params["w1_ih"].T.astype(jnp.float32)                       # (D, 4H1)
    w1h = params["w1_hh"].T.astype(jnp.float32)                       # (H1, 4H1)
    b1 = (params["b1_ih"] + params["b1_hh"])[None, :].astype(jnp.float32)
    w2i = params["w2_ih"].T.astype(jnp.float32)                       # (H1, 4nf)
    w2h = params["w2_hh"].T.astype(jnp.float32)                       # (nf, 4nf)
    b2 = (params["b2_ih"] + params["b2_hh"])[None, :].astype(jnp.float32)
    wd = params["wd"].T.astype(jnp.float32)                           # (nf, nf)
    bd = params["bd"][None, :].astype(jnp.float32)                    # (1, nf)

    bb = _pick_batch_block(b0)
    grid = (b0 // bb,)

    def full(a):
        return pl.BlockSpec(a.shape, lambda i: (0,) * a.ndim)

    out_slab = pl.pallas_call(
        decoder_kernel,
        out_shape=jax.ShapeDtypeStruct((b0, seq_len * nf), jnp.float32),
        grid=grid,
        in_specs=[
            pl.BlockSpec((bb, D), lambda i: (i, 0)),      # unique latents, blocked
            full(w1i), full(w1h), full(b1),
            full(w2i), full(w2h), full(b2), full(wd), full(bd),
        ],
        out_specs=pl.BlockSpec((bb, seq_len * nf), lambda i: (i, 0)),
        compiler_params=pltpu.CompilerParams(
            dimension_semantics=("parallel",)),
    )(x_lat, w1i, w1h, b1, w2i, w2h, b2, wd, bd)

    out = out_slab.reshape(b0, seq_len, nf)
    # Re-apply the torch batch repeat: rows are [y_0..y_{b0-1}] tiled b0 times.
    return jnp.tile(out, (b0, 1, 1))                       # (b0*b0, seq_len, nf)


# ---------------------------------------------------------------------------
# Pure-JAX reference (for a sanity check)
# ---------------------------------------------------------------------------
def _lstm_ref(x_seq, w_ih, w_hh, b_ih, b_hh):
    B = x_seq.shape[0]
    H = w_hh.shape[1]

    def step(carry, x_t):
        h, c = carry
        gates = x_t @ w_ih.T + h @ w_hh.T + b_ih + b_hh
        i = jax.nn.sigmoid(gates[:, :H])
        f = jax.nn.sigmoid(gates[:, H:2 * H])
        g = jnp.tanh(gates[:, 2 * H:3 * H])
        o = jax.nn.sigmoid(gates[:, 3 * H:])
        c = f * c + i * g
        h = o * jnp.tanh(c)
        return (h, c), h

    init = (jnp.zeros((B, H), jnp.float32), jnp.zeros((B, H), jnp.float32))
    _, ys = lax.scan(step, init, jnp.swapaxes(x_seq, 0, 1))
    return jnp.swapaxes(ys, 0, 1)


def decoder_reference(params, x, seq_len):
    D = params["input_dim"]
    b0 = x.shape[0]
    x_rep = jnp.tile(x, (b0, seq_len, 1))
    x_rep = x_rep.reshape((x_rep.shape[0], seq_len, D)).astype(jnp.float32)
    h = _lstm_ref(x_rep, params["w1_ih"], params["w1_hh"],
                  params["b1_ih"], params["b1_hh"])
    h = _lstm_ref(h, params["w2_ih"], params["w2_hh"],
                  params["b2_ih"], params["b2_hh"])
    return h @ params["wd"].T + params["bd"]


# ---------------------------------------------------------------------------
if __name__ == "__main__":
    key = jax.random.PRNGKey(0)
    k_param, k_x = jax.random.split(key)

    INPUT_DIM = 16      # -> hidden_dim = 32
    N_FEATURES = 1
    SEQ_LEN = 8
    B = 2               # x: (B, 1, INPUT_DIM); torch repeat -> effective batch B*B

    params = init_decoder_params(k_param, input_dim=INPUT_DIM, n_features=N_FEATURES)
    x = jax.random.normal(k_x, (B, 1, INPUT_DIM), jnp.float32)

    out = decoder_forward(params, x, SEQ_LEN)
    out = jax.block_until_ready(out)

    ref = jax.block_until_ready(decoder_reference(params, x, SEQ_LEN))
    assert out.shape == (B * B, SEQ_LEN, N_FEATURES), out.shape
    err = float(jnp.max(jnp.abs(out - ref)))
    assert jnp.allclose(out, ref, atol=1e-4, rtol=1e-4), err

    print("KERNEL_OK")
</pallas_src>

<mosaic_0001>
module attributes {stable_mosaic.version = 11 : i64} {
  func.func @decoder_kernel(%arg0: i32, %arg1: memref<2x16xf32, #tpu.memory_space<vmem>>, %arg2: memref<16x128xf32, #tpu.memory_space<vmem>>, %arg3: memref<32x128xf32, #tpu.memory_space<vmem>>, %arg4: memref<1x128xf32, #tpu.memory_space<vmem>>, %arg5: memref<32x4xf32, #tpu.memory_space<vmem>>, %arg6: memref<1x4xf32, #tpu.memory_space<vmem>>, %arg7: memref<1x4xf32, #tpu.memory_space<vmem>>, %arg8: memref<1x1xf32, #tpu.memory_space<vmem>>, %arg9: memref<1x1xf32, #tpu.memory_space<vmem>>, %arg10: memref<2x8xf32, #tpu.memory_space<vmem>>) attributes {dimension_semantics = [#tpu.dimension_semantics<parallel>], iteration_bounds = array<i64: 1>, scalar_prefetch = 0 : i64, scratch_operands = 0 : i64, tpu.core_type = #tpu.core_type<tc>, window_params = [{transform_indices = @transform_0, window_bounds = array<i64: 2, 16>}, {pipeline_mode = #tpu.pipeline_mode<synchronous>, transform_indices = @transform_1, window_bounds = array<i64: 16, 128>}, {pipeline_mode = #tpu.pipeline_mode<synchronous>, transform_indices = @transform_2, window_bounds = array<i64: 32, 128>}, {pipeline_mode = #tpu.pipeline_mode<synchronous>, transform_indices = @transform_3, window_bounds = array<i64: 1, 128>}, {pipeline_mode = #tpu.pipeline_mode<synchronous>, transform_indices = @transform_4, window_bounds = array<i64: 32, 4>}, {pipeline_mode = #tpu.pipeline_mode<synchronous>, transform_indices = @transform_5, window_bounds = array<i64: 1, 4>}, {pipeline_mode = #tpu.pipeline_mode<synchronous>, transform_indices = @transform_6, window_bounds = array<i64: 1, 4>}, {pipeline_mode = #tpu.pipeline_mode<synchronous>, transform_indices = @transform_7, window_bounds = array<i64: 1, 1>}, {pipeline_mode = #tpu.pipeline_mode<synchronous>, transform_indices = @transform_8, window_bounds = array<i64: 1, 1>}, {transform_indices = @transform_9, window_bounds = array<i64: 2, 8>}]} {
    %c0 = arith.constant 0 : index
    %c0_0 = arith.constant 0 : index
    %0 = vector.load %arg1[%c0, %c0_0] : memref<2x16xf32, #tpu.memory_space<vmem>>, vector<2x16xf32>
    %c0_1 = arith.constant 0 : index
    %c0_2 = arith.constant 0 : index
    %1 = vector.load %arg2[%c0_1, %c0_2] : memref<16x128xf32, #tpu.memory_space<vmem>>, vector<16x128xf32>
    %cst = arith.constant dense<0.000000e+00> : vector<2x128xf32>
    %2 = tpu.matmul %0, %1, %cst {dimension_numbers = #tpu.dot_dimension_numbers<[1], [0], [0], [1], [0, 0, 1, 1], [], []>} : vector<2x16xf32>, vector<16x128xf32>, vector<2x128xf32> -> vector<2x128xf32>
    %c0_3 = arith.constant 0 : index
    %c0_4 = arith.constant 0 : index
    %3 = vector.load %arg4[%c0_3, %c0_4] : memref<1x128xf32, #tpu.memory_space<vmem>>, vector<1x128xf32>
    %4 = vector.broadcast %3 : vector<1x128xf32> to vector<2x128xf32>
    %5 = arith.addf %2, %4 : vector<2x128xf32>
    %c0_5 = arith.constant 0 : index
    %c0_6 = arith.constant 0 : index
    %6 = vector.load %arg3[%c0_5, %c0_6] : memref<32x128xf32, #tpu.memory_space<vmem>>, vector<32x128xf32>
    %c0_7 = arith.constant 0 : index
    %c0_8 = arith.constant 0 : index
    %7 = vector.load %arg5[%c0_7, %c0_8] : memref<32x4xf32, #tpu.memory_space<vmem>>, vector<32x4xf32>
    %c0_9 = arith.constant 0 : index
    %c0_10 = arith.constant 0 : index
    %8 = vector.load %arg6[%c0_9, %c0_10] : memref<1x4xf32, #tpu.memory_space<vmem>>, vector<1x4xf32>
    %c0_11 = arith.constant 0 : index
    %c0_12 = arith.constant 0 : index
    %9 = vector.load %arg7[%c0_11, %c0_12] : memref<1x4xf32, #tpu.memory_space<vmem>>, vector<1x4xf32>
    %10 = vector.shape_cast %9 : vector<1x4xf32> to vector<1x4xf32>
    %11 = vector.broadcast %10 : vector<1x4xf32> to vector<2x4xf32>
    %c0_13 = arith.constant 0 : index
    %c0_14 = arith.constant 0 : index
    %12 = vector.load %arg8[%c0_13, %c0_14] : memref<1x1xf32, #tpu.memory_space<vmem>>, vector<1x1xf32>
    %c0_15 = arith.constant 0 : index
    %c0_16 = arith.constant 0 : index
    %13 = vector.load %arg9[%c0_15, %c0_16] : memref<1x1xf32, #tpu.memory_space<vmem>>, vector<1x1xf32>
    %cst_17 = arith.constant 0.000000e+00 : f32
    %14 = vector.broadcast %cst_17 : f32 to vector<2x32xf32>
    %cst_18 = arith.constant 0.000000e+00 : f32
    %15 = vector.broadcast %cst_18 : f32 to vector<2x32xf32>
    %cst_19 = arith.constant 0.000000e+00 : f32
    %16 = vector.broadcast %cst_19 : f32 to vector<2x1xf32>
    %cst_20 = arith.constant 0.000000e+00 : f32
    %17 = vector.broadcast %cst_20 : f32 to vector<2x1xf32>
    %cst_21 = arith.constant dense<0.000000e+00> : vector<2x128xf32>
    %18 = tpu.matmul %14, %6, %cst_21 {dimension_numbers = #tpu.dot_dimension_numbers<[1], [0], [0], [1], [0, 0, 1, 1], [], []>} : vector<2x32xf32>, vector<32x128xf32>, vector<2x128xf32> -> vector<2x128xf32>
    %19 = arith.addf %18, %5 : vector<2x128xf32>
    %20 = vector.extract_strided_slice %19 {offsets = [0, 0], sizes = [2, 32], strides = [1, 1]} : vector<2x128xf32> to vector<2x32xf32>
    %21 = arith.negf %20 : vector<2x32xf32>
    %22 = math.exp %21 : vector<2x32xf32>
    %cst_22 = arith.constant 1.000000e+00 : f32
    %23 = vector.broadcast %cst_22 : f32 to vector<2x32xf32>
    %24 = arith.addf %23, %22 : vector<2x32xf32>
    %25 = arith.divf %23, %24 : vector<2x32xf32>
    %26 = vector.extract_strided_slice %19 {offsets = [0, 32], sizes = [2, 32], strides = [1, 1]} : vector<2x128xf32> to vector<2x32xf32>
    %27 = arith.negf %26 : vector<2x32xf32>
    %28 = math.exp %27 : vector<2x32xf32>
    %cst_23 = arith.constant 1.000000e+00 : f32
    %29 = vector.broadcast %cst_23 : f32 to vector<2x32xf32>
    %30 = arith.addf %29, %28 : vector<2x32xf32>
    %31 = arith.divf %29, %30 : vector<2x32xf32>
    %32 = vector.extract_strided_slice %19 {offsets = [0, 64], sizes = [2, 32], strides = [1, 1]} : vector<2x128xf32> to vector<2x32xf32>
    %33 = math.tanh %32 : vector<2x32xf32>
    %34 = vector.extract_strided_slice %19 {offsets = [0, 96], sizes = [2, 32], strides = [1, 1]} : vector<2x128xf32> to vector<2x32xf32>
    %35 = arith.negf %34 : vector<2x32xf32>
    %36 = math.exp %35 : vector<2x32xf32>
    %cst_24 = arith.constant 1.000000e+00 : f32
    %37 = vector.broadcast %cst_24 : f32 to vector<2x32xf32>
    %38 = arith.addf %37, %36 : vector<2x32xf32>
    %39 = arith.divf %37, %38 : vector<2x32xf32>
    %40 = arith.mulf %31, %15 : vector<2x32xf32>
    %41 = arith.mulf %25, %33 : vector<2x32xf32>
    %42 = arith.addf %40, %41 : vector<2x32xf32>
    %43 = math.tanh %42 : vector<2x32xf32>
    %44 = arith.mulf %39, %43 : vector<2x32xf32>
    %cst_25 = arith.constant dense<0.000000e+00> : vector<2x4xf32>
    %45 = tpu.matmul %44, %7, %cst_25 {dimension_numbers = #tpu.dot_dimension_numbers<[1], [0], [0], [1], [0, 0, 1, 1], [], []>} : vector<2x32xf32>, vector<32x4xf32>, vector<2x4xf32> -> vector<2x4xf32>
    %46 = arith.addf %45, %11 : vector<2x4xf32>
    %47 = vector.broadcast %16 : vector<2x1xf32> to vector<2x4xf32>
    %48 = vector.broadcast %8 : vector<1x4xf32> to vector<2x4xf32>
    %49 = arith.mulf %47, %48 : vector<2x4xf32>
    %50 = arith.addf %46, %49 : vector<2x4xf32>
    %51 = vector.extract_strided_slice %50 {offsets = [0, 0], sizes = [2, 1], strides = [1, 1]} : vector<2x4xf32> to vector<2x1xf32>
    %52 = arith.negf %51 : vector<2x1xf32>
    %53 = math.exp %52 : vector<2x1xf32>
    %cst_26 = arith.constant 1.000000e+00 : f32
    %54 = vector.broadcast %cst_26 : f32 to vector<2x1xf32>
    %55 = arith.addf %54, %53 : vector<2x1xf32>
    %56 = arith.divf %54, %55 : vector<2x1xf32>
    %57 = vector.extract_strided_slice %50 {offsets = [0, 1], sizes = [2, 1], strides = [1, 1]} : vector<2x4xf32> to vector<2x1xf32>
    %58 = arith.negf %57 : vector<2x1xf32>
    %59 = math.exp %58 : vector<2x1xf32>
    %cst_27 = arith.constant 1.000000e+00 : f32
    %60 = vector.broadcast %cst_27 : f32 to vector<2x1xf32>
    %61 = arith.addf %60, %59 : vector<2x1xf32>
    %62 = arith.divf %60, %61 : vector<2x1xf32>
    %63 = vector.extract_strided_slice %50 {offsets = [0, 2], sizes = [2, 1], strides = [1, 1]} : vector<2x4xf32> to vector<2x1xf32>
    %64 = math.tanh %63 : vector<2x1xf32>
    %65 = vector.extract_strided_slice %50 {offsets = [0, 3], sizes = [2, 1], strides = [1, 1]} : vector<2x4xf32> to vector<2x1xf32>
    %66 = arith.negf %65 : vector<2x1xf32>
    %67 = math.exp %66 : vector<2x1xf32>
    %cst_28 = arith.constant 1.000000e+00 : f32
    %68 = vector.broadcast %cst_28 : f32 to vector<2x1xf32>
    %69 = arith.addf %68, %67 : vector<2x1xf32>
    %70 = arith.divf %68, %69 : vector<2x1xf32>
    %71 = arith.mulf %62, %17 : vector<2x1xf32>
    %72 = arith.mulf %56, %64 : vector<2x1xf32>
    %73 = arith.addf %71, %72 : vector<2x1xf32>
    %74 = math.tanh %73 : vector<2x1xf32>
    %75 = arith.mulf %70, %74 : vector<2x1xf32>
    %76 = vector.broadcast %12 : vector<1x1xf32> to vector<2x1xf32>
    %77 = arith.mulf %75, %76 : vector<2x1xf32>
    %78 = vector.broadcast %13 : vector<1x1xf32> to vector<2x1xf32>
    %79 = arith.addf %77, %78 : vector<2x1xf32>
    %c0_29 = arith.constant 0 : index
    %c0_30 = arith.constant 0 : index
    %80 = vector.load %arg10[%c0_29, %c0_30] : memref<2x8xf32, #tpu.memory_space<vmem>>, vector<2x1xf32>
    tpu.vector_store %arg10[%c0_29, %c0_30], %79 {strides = array<i32>} : memref<2x8xf32, #tpu.memory_space<vmem>>, vector<2x1xf32>,
    %cst_31 = arith.constant dense<0.000000e+00> : vector<2x128xf32>
    %81 = tpu.matmul %44, %6, %cst_31 {dimension_numbers = #tpu.dot_dimension_numbers<[1], [0], [0], [1], [0, 0, 1, 1], [], []>} : vector<2x32xf32>, vector<32x128xf32>, vector<2x128xf32> -> vector<2x128xf32>
    %82 = arith.addf %81, %5 : vector<2x128xf32>
    %83 = vector.extract_strided_slice %82 {offsets = [0, 0], sizes = [2, 32], strides = [1, 1]} : vector<2x128xf32> to vector<2x32xf32>
    %84 = arith.negf %83 : vector<2x32xf32>
    %85 = math.exp %84 : vector<2x32xf32>
    %cst_32 = arith.constant 1.000000e+00 : f32
    %86 = vector.broadcast %cst_32 : f32 to vector<2x32xf32>
    %87 = arith.addf %86, %85 : vector<2x32xf32>
    %88 = arith.divf %86, %87 : vector<2x32xf32>
    %89 = vector.extract_strided_slice %82 {offsets = [0, 32], sizes = [2, 32], strides = [1, 1]} : vector<2x128xf32> to vector<2x32xf32>
    %90 = arith.negf %89 : vector<2x32xf32>
    %91 = math.exp %90 : vector<2x32xf32>
    %cst_33 = arith.constant 1.000000e+00 : f32
    %92 = vector.broadcast %cst_33 : f32 to vector<2x32xf32>
    %93 = arith.addf %92, %91 : vector<2x32xf32>
    %94 = arith.divf %92, %93 : vector<2x32xf32>
    %95 = vector.extract_strided_slice %82 {offsets = [0, 64], sizes = [2, 32], strides = [1, 1]} : vector<2x128xf32> to vector<2x32xf32>
    %96 = math.tanh %95 : vector<2x32xf32>
    %97 = vector.extract_strided_slice %82 {offsets = [0, 96], sizes = [2, 32], strides = [1, 1]} : vector<2x128xf32> to vector<2x32xf32>
    %98 = arith.negf %97 : vector<2x32xf32>
    %99 = math.exp %98 : vector<2x32xf32>
    %cst_34 = arith.constant 1.000000e+00 : f32
    %100 = vector.broadcast %cst_34 : f32 to vector<2x32xf32>
    %101 = arith.addf %100, %99 : vector<2x32xf32>
    %102 = arith.divf %100, %101 : vector<2x32xf32>
    %103 = arith.mulf %94, %42 : vector<2x32xf32>
    %104 = arith.mulf %88, %96 : vector<2x32xf32>
    %105 = arith.addf %103, %104 : vector<2x32xf32>
    %106 = math.tanh %105 : vector<2x32xf32>
    %107 = arith.mulf %102, %106 : vector<2x32xf32>
    %cst_35 = arith.constant dense<0.000000e+00> : vector<2x4xf32>
    %108 = tpu.matmul %107, %7, %cst_35 {dimension_numbers = #tpu.dot_dimension_numbers<[1], [0], [0], [1], [0, 0, 1, 1], [], []>} : vector<2x32xf32>, vector<32x4xf32>, vector<2x4xf32> -> vector<2x4xf32>
    %109 = arith.addf %108, %11 : vector<2x4xf32>
    %110 = vector.broadcast %75 : vector<2x1xf32> to vector<2x4xf32>
    %111 = vector.broadcast %8 : vector<1x4xf32> to vector<2x4xf32>
    %112 = arith.mulf %110, %111 : vector<2x4xf32>
    %113 = arith.addf %109, %112 : vector<2x4xf32>
    %114 = vector.extract_strided_slice %113 {offsets = [0, 0], sizes = [2, 1], strides = [1, 1]} : vector<2x4xf32> to vector<2x1xf32>
    %115 = arith.negf %114 : vector<2x1xf32>
    %116 = math.exp %115 : vector<2x1xf32>
    %cst_36 = arith.constant 1.000000e+00 : f32
    %117 = vector.broadcast %cst_36 : f32 to vector<2x1xf32>
    %118 = arith.addf %117, %116 : vector<2x1xf32>
    %119 = arith.divf %117, %118 : vector<2x1xf32>
    %120 = vector.extract_strided_slice %113 {offsets = [0, 1], sizes = [2, 1], strides = [1, 1]} : vector<2x4xf32> to vector<2x1xf32>
    %121 = arith.negf %120 : vector<2x1xf32>
    %122 = math.exp %121 : vector<2x1xf32>
    %cst_37 = arith.constant 1.000000e+00 : f32
    %123 = vector.broadcast %cst_37 : f32 to vector<2x1xf32>
    %124 = arith.addf %123, %122 : vector<2x1xf32>
    %125 = arith.divf %123, %124 : vector<2x1xf32>
    %126 = vector.extract_strided_slice %113 {offsets = [0, 2], sizes = [2, 1], strides = [1, 1]} : vector<2x4xf32> to vector<2x1xf32>
    %127 = math.tanh %126 : vector<2x1xf32>
    %128 = vector.extract_strided_slice %113 {offsets = [0, 3], sizes = [2, 1], strides = [1, 1]} : vector<2x4xf32> to vector<2x1xf32>
    %129 = arith.negf %128 : vector<2x1xf32>
    %130 = math.exp %129 : vector<2x1xf32>
    %cst_38 = arith.constant 1.000000e+00 : f32
    %131 = vector.broadcast %cst_38 : f32 to vector<2x1xf32>
    %132 = arith.addf %131, %130 : vector<2x1xf32>
    %133 = arith.divf %131, %132 : vector<2x1xf32>
    %134 = arith.mulf %125, %73 : vector<2x1xf32>
    %135 = arith.mulf %119, %127 : vector<2x1xf32>
    %136 = arith.addf %134, %135 : vector<2x1xf32>
    %137 = math.tanh %136 : vector<2x1xf32>
    %138 = arith.mulf %133, %137 : vector<2x1xf32>
    %139 = vector.broadcast %12 : vector<1x1xf32> to vector<2x1xf32>
    %140 = arith.mulf %138, %139 : vector<2x1xf32>
    %141 = vector.broadcast %13 : vector<1x1xf32> to vector<2x1xf32>
    %142 = arith.addf %140, %141 : vector<2x1xf32>
    %c0_39 = arith.constant 0 : index
    %c1 = arith.constant 1 : index
    %143 = vector.load %arg10[%c0_39, %c1] : memref<2x8xf32, #tpu.memory_space<vmem>>, vector<2x1xf32>
    tpu.vector_store %arg10[%c0_39, %c1], %142 {strides = array<i32>} : memref<2x8xf32, #tpu.memory_space<vmem>>, vector<2x1xf32>,
    %cst_40 = arith.constant dense<0.000000e+00> : vector<2x128xf32>
    %144 = tpu.matmul %107, %6, %cst_40 {dimension_numbers = #tpu.dot_dimension_numbers<[1], [0], [0], [1], [0, 0, 1, 1], [], []>} : vector<2x32xf32>, vector<32x128xf32>, vector<2x128xf32> -> vector<2x128xf32>
    %145 = arith.addf %144, %5 : vector<2x128xf32>
    %146 = vector.extract_strided_slice %145 {offsets = [0, 0], sizes = [2, 32], strides = [1, 1]} : vector<2x128xf32> to vector<2x32xf32>
    %147 = arith.negf %146 : vector<2x32xf32>
    %148 = math.exp %147 : vector<2x32xf32>
    %cst_41 = arith.constant 1.000000e+00 : f32
    %149 = vector.broadcast %cst_41 : f32 to vector<2x32xf32>
    %150 = arith.addf %149, %148 : vector<2x32xf32>
    %151 = arith.divf %149, %150 : vector<2x32xf32>
    %152 = vector.extract_strided_slice %145 {offsets = [0, 32], sizes = [2, 32], strides = [1, 1]} : vector<2x128xf32> to vector<2x32xf32>
    %153 = arith.negf %152 : vector<2x32xf32>
    %154 = math.exp %153 : vector<2x32xf32>
    %cst_42 = arith.constant 1.000000e+00 : f32
    %155 = vector.broadcast %cst_42 : f32 to vector<2x32xf32>
    %156 = arith.addf %155, %154 : vector<2x32xf32>
    %157 = arith.divf %155, %156 : vector<2x32xf32>
    %158 = vector.extract_strided_slice %145 {offsets = [0, 64], sizes = [2, 32], strides = [1, 1]} : vector<2x128xf32> to vector<2x32xf32>
    %159 = math.tanh %158 : vector<2x32xf32>
    %160 = vector.extract_strided_slice %145 {offsets = [0, 96], sizes = [2, 32], strides = [1, 1]} : vector<2x128xf32> to vector<2x32xf32>
    %161 = arith.negf %160 : vector<2x32xf32>
    %162 = math.exp %161 : vector<2x32xf32>
    %cst_43 = arith.constant 1.000000e+00 : f32
    %163 = vector.broadcast %cst_43 : f32 to vector<2x32xf32>
    %164 = arith.addf %163, %162 : vector<2x32xf32>
    %165 = arith.divf %163, %164 : vector<2x32xf32>
    %166 = arith.mulf %157, %105 : vector<2x32xf32>
    %167 = arith.mulf %151, %159 : vector<2x32xf32>
    %168 = arith.addf %166, %167 : vector<2x32xf32>
    %169 = math.tanh %168 : vector<2x32xf32>
    %170 = arith.mulf %165, %169 : vector<2x32xf32>
    %cst_44 = arith.constant dense<0.000000e+00> : vector<2x4xf32>
    %171 = tpu.matmul %170, %7, %cst_44 {dimension_numbers = #tpu.dot_dimension_numbers<[1], [0], [0], [1], [0, 0, 1, 1], [], []>} : vector<2x32xf32>, vector<32x4xf32>, vector<2x4xf32> -> vector<2x4xf32>
    %172 = arith.addf %171, %11 : vector<2x4xf32>
    %173 = vector.broadcast %138 : vector<2x1xf32> to vector<2x4xf32>
    %174 = vector.broadcast %8 : vector<1x4xf32> to vector<2x4xf32>
    %175 = arith.mulf %173, %174 : vector<2x4xf32>
    %176 = arith.addf %172, %175 : vector<2x4xf32>
    %177 = vector.extract_strided_slice %176 {offsets = [0, 0], sizes = [2, 1], strides = [1, 1]} : vector<2x4xf32> to vector<2x1xf32>
    %178 = arith.negf %177 : vector<2x1xf32>
    %179 = math.exp %178 : vector<2x1xf32>
    %cst_45 = arith.constant 1.000000e+00 : f32
    %180 = vector.broadcast %cst_45 : f32 to vector<2x1xf32>
    %181 = arith.addf %180, %179 : vector<2x1xf32>
    %182 = arith.divf %180, %181 : vector<2x1xf32>
    %183 = vector.extract_strided_slice %176 {offsets = [0, 1], sizes = [2, 1], strides = [1, 1]} : vector<2x4xf32> to vector<2x1xf32>
    %184 = arith.negf %183 : vector<2x1xf32>
    %185 = math.exp %184 : vector<2x1xf32>
    %cst_46 = arith.constant 1.000000e+00 : f32
    %186 = vector.broadcast %cst_46 : f32 to vector<2x1xf32>
    %187 = arith.addf %186, %185 : vector<2x1xf32>
    %188 = arith.divf %186, %187 : vector<2x1xf32>
    %189 = vector.extract_strided_slice %176 {offsets = [0, 2], sizes = [2, 1], strides = [1, 1]} : vector<2x4xf32> to vector<2x1xf32>
    %190 = math.tanh %189 : vector<2x1xf32>
    %191 = vector.extract_strided_slice %176 {offsets = [0, 3], sizes = [2, 1], strides = [1, 1]} : vector<2x4xf32> to vector<2x1xf32>
    %192 = arith.negf %191 : vector<2x1xf32>
    %193 = math.exp %192 : vector<2x1xf32>
    %cst_47 = arith.constant 1.000000e+00 : f32
    %194 = vector.broadcast %cst_47 : f32 to vector<2x1xf32>
    %195 = arith.addf %194, %193 : vector<2x1xf32>
    %196 = arith.divf %194, %195 : vector<2x1xf32>
    %197 = arith.mulf %188, %136 : vector<2x1xf32>
    %198 = arith.mulf %182, %190 : vector<2x1xf32>
    %199 = arith.addf %197, %198 : vector<2x1xf32>
    %200 = math.tanh %199 : vector<2x1xf32>
    %201 = arith.mulf %196, %200 : vector<2x1xf32>
    %202 = vector.broadcast %12 : vector<1x1xf32> to vector<2x1xf32>
    %203 = arith.mulf %201, %202 : vector<2x1xf32>
    %204 = vector.broadcast %13 : vector<1x1xf32> to vector<2x1xf32>
    %205 = arith.addf %203, %204 : vector<2x1xf32>
    %c0_48 = arith.constant 0 : index
    %c2 = arith.constant 2 : index
    %206 = vector.load %arg10[%c0_48, %c2] : memref<2x8xf32, #tpu.memory_space<vmem>>, vector<2x1xf32>
    tpu.vector_store %arg10[%c0_48, %c2], %205 {strides = array<i32>} : memref<2x8xf32, #tpu.memory_space<vmem>>, vector<2x1xf32>,
    %cst_49 = arith.constant dense<0.000000e+00> : vector<2x128xf32>
    %207 = tpu.matmul %170, %6, %cst_49 {dimension_numbers = #tpu.dot_dimension_numbers<[1], [0], [0], [1], [0, 0, 1, 1], [], []>} : vector<2x32xf32>, vector<32x128xf32>, vector<2x128xf32> -> vector<2x128xf32>
    %208 = arith.addf %207, %5 : vector<2x128xf32>
    %209 = vector.extract_strided_slice %208 {offsets = [0, 0], sizes = [2, 32], strides = [1, 1]} : vector<2x128xf32> to vector<2x32xf32>
    %210 = arith.negf %209 : vector<2x32xf32>
    %211 = math.exp %210 : vector<2x32xf32>
    %cst_50 = arith.constant 1.000000e+00 : f32
    %212 = vector.broadcast %cst_50 : f32 to vector<2x32xf32>
    %213 = arith.addf %212, %211 : vector<2x32xf32>
    %214 = arith.divf %212, %213 : vector<2x32xf32>
    %215 = vector.extract_strided_slice %208 {offsets = [0, 32], sizes = [2, 32], strides = [1, 1]} : vector<2x128xf32> to vector<2x32xf32>
    %216 = arith.negf %215 : vector<2x32xf32>
    %217 = math.exp %216 : vector<2x32xf32>
    %cst_51 = arith.constant 1.000000e+00 : f32
    %218 = vector.broadcast %cst_51 : f32 to vector<2x32xf32>
    %219 = arith.addf %218, %217 : vector<2x32xf32>
    %220 = arith.divf %218, %219 : vector<2x32xf32>
    %221 = vector.extract_strided_slice %208 {offsets = [0, 64], sizes = [2, 32], strides = [1, 1]} : vector<2x128xf32> to vector<2x32xf32>
    %222 = math.tanh %221 : vector<2x32xf32>
    %223 = vector.extract_strided_slice %208 {offsets = [0, 96], sizes = [2, 32], strides = [1, 1]} : vector<2x128xf32> to vector<2x32xf32>
    %224 = arith.negf %223 : vector<2x32xf32>
    %225 = math.exp %224 : vector<2x32xf32>
    %cst_52 = arith.constant 1.000000e+00 : f32
    %226 = vector.broadcast %cst_52 : f32 to vector<2x32xf32>
    %227 = arith.addf %226, %225 : vector<2x32xf32>
    %228 = arith.divf %226, %227 : vector<2x32xf32>
    %229 = arith.mulf %220, %168 : vector<2x32xf32>
    %230 = arith.mulf %214, %222 : vector<2x32xf32>
    %231 = arith.addf %229, %230 : vector<2x32xf32>
    %232 = math.tanh %231 : vector<2x32xf32>
    %233 = arith.mulf %228, %232 : vector<2x32xf32>
    %cst_53 = arith.constant dense<0.000000e+00> : vector<2x4xf32>
    %234 = tpu.matmul %233, %7, %cst_53 {dimension_numbers = #tpu.dot_dimension_numbers<[1], [0], [0], [1], [0, 0, 1, 1], [], []>} : vector<2x32xf32>, vector<32x4xf32>, vector<2x4xf32> -> vector<2x4xf32>
    %235 = arith.addf %234, %11 : vector<2x4xf32>
    %236 = vector.broadcast %201 : vector<2x1xf32> to vector<2x4xf32>
    %237 = vector.broadcast %8 : vector<1x4xf32> to vector<2x4xf32>
    %238 = arith.mulf %236, %237 : vector<2x4xf32>
    %239 = arith.addf %235, %238 : vector<2x4xf32>
    %240 = vector.extract_strided_slice %239 {offsets = [0, 0], sizes = [2, 1], strides = [1, 1]} : vector<2x4xf32> to vector<2x1xf32>
    %241 = arith.negf %240 : vector<2x1xf32>
    %242 = math.exp %241 : vector<2x1xf32>
    %cst_54 = arith.constant 1.000000e+00 : f32
    %243 = vector.broadcast %cst_54 : f32 to vector<2x1xf32>
    %244 = arith.addf %243, %242 : vector<2x1xf32>
    %245 = arith.divf %243, %244 : vector<2x1xf32>
    %246 = vector.extract_strided_slice %239 {offsets = [0, 1], sizes = [2, 1], strides = [1, 1]} : vector<2x4xf32> to vector<2x1xf32>
    %247 = arith.negf %246 : vector<2x1xf32>
    %248 = math.exp %247 : vector<2x1xf32>
    %cst_55 = arith.constant 1.000000e+00 : f32
    %249 = vector.broadcast %cst_55 : f32 to vector<2x1xf32>
    %250 = arith.addf %249, %248 : vector<2x1xf32>
    %251 = arith.divf %249, %250 : vector<2x1xf32>
    %252 = vector.extract_strided_slice %239 {offsets = [0, 2], sizes = [2, 1], strides = [1, 1]} : vector<2x4xf32> to vector<2x1xf32>
    %253 = math.tanh %252 : vector<2x1xf32>
    %254 = vector.extract_strided_slice %239 {offsets = [0, 3], sizes = [2, 1], strides = [1, 1]} : vector<2x4xf32> to vector<2x1xf32>
    %255 = arith.negf %254 : vector<2x1xf32>
    %256 = math.exp %255 : vector<2x1xf32>
    %cst_56 = arith.constant 1.000000e+00 : f32
    %257 = vector.broadcast %cst_56 : f32 to vector<2x1xf32>
    %258 = arith.addf %257, %256 : vector<2x1xf32>
    %259 = arith.divf %257, %258 : vector<2x1xf32>
    %260 = arith.mulf %251, %199 : vector<2x1xf32>
    %261 = arith.mulf %245, %253 : vector<2x1xf32>
    %262 = arith.addf %260, %261 : vector<2x1xf32>
    %263 = math.tanh %262 : vector<2x1xf32>
    %264 = arith.mulf %259, %263 : vector<2x1xf32>
    %265 = vector.broadcast %12 : vector<1x1xf32> to vector<2x1xf32>
    %266 = arith.mulf %264, %265 : vector<2x1xf32>
    %267 = vector.broadcast %13 : vector<1x1xf32> to vector<2x1xf32>
    %268 = arith.addf %266, %267 : vector<2x1xf32>
    %c0_57 = arith.constant 0 : index
    %c3 = arith.constant 3 : index
    %269 = vector.load %arg10[%c0_57, %c3] : memref<2x8xf32, #tpu.memory_space<vmem>>, vector<2x1xf32>
    tpu.vector_store %arg10[%c0_57, %c3], %268 {strides = array<i32>} : memref<2x8xf32, #tpu.memory_space<vmem>>, vector<2x1xf32>,
    %cst_58 = arith.constant dense<0.000000e+00> : vector<2x128xf32>
    %270 = tpu.matmul %233, %6, %cst_58 {dimension_numbers = #tpu.dot_dimension_numbers<[1], [0], [0], [1], [0, 0, 1, 1], [], []>} : vector<2x32xf32>, vector<32x128xf32>, vector<2x128xf32> -> vector<2x128xf32>
    %271 = arith.addf %270, %5 : vector<2x128xf32>
    %272 = vector.extract_strided_slice %271 {offsets = [0, 0], sizes = [2, 32], strides = [1, 1]} : vector<2x128xf32> to vector<2x32xf32>
    %273 = arith.negf %272 : vector<2x32xf32>
    %274 = math.exp %273 : vector<2x32xf32>
    %cst_59 = arith.constant 1.000000e+00 : f32
    %275 = vector.broadcast %cst_59 : f32 to vector<2x32xf32>
    %276 = arith.addf %275, %274 : vector<2x32xf32>
    %277 = arith.divf %275, %276 : vector<2x32xf32>
    %278 = vector.extract_strided_slice %271 {offsets = [0, 32], sizes = [2, 32], strides = [1, 1]} : vector<2x128xf32> to vector<2x32xf32>
    %279 = arith.negf %278 : vector<2x32xf32>
    %280 = math.exp %279 : vector<2x32xf32>
    %cst_60 = arith.constant 1.000000e+00 : f32
    %281 = vector.broadcast %cst_60 : f32 to vector<2x32xf32>
    %282 = arith.addf %281, %280 : vector<2x32xf32>
    %283 = arith.divf %281, %282 : vector<2x32xf32>
    %284 = vector.extract_strided_slice %271 {offsets = [0, 64], sizes = [2, 32], strides = [1, 1]} : vector<2x128xf32> to vector<2x32xf32>
    %285 = math.tanh %284 : vector<2x32xf32>
    %286 = vector.extract_strided_slice %271 {offsets = [0, 96], sizes = [2, 32], strides = [1, 1]} : vector<2x128xf32> to vector<2x32xf32>
    %287 = arith.negf %286 : vector<2x32xf32>
    %288 = math.exp %287 : vector<2x32xf32>
    %cst_61 = arith.constant 1.000000e+00 : f32
    %289 = vector.broadcast %cst_61 : f32 to vector<2x32xf32>
    %290 = arith.addf %289, %288 : vector<2x32xf32>
    %291 = arith.divf %289, %290 : vector<2x32xf32>
    %292 = arith.mulf %283, %231 : vector<2x32xf32>
    %293 = arith.mulf %277, %285 : vector<2x32xf32>
    %294 = arith.addf %292, %293 : vector<2x32xf32>
    %295 = math.tanh %294 : vector<2x32xf32>
    %296 = arith.mulf %291, %295 : vector<2x32xf32>
    %cst_62 = arith.constant dense<0.000000e+00> : vector<2x4xf32>
    %297 = tpu.matmul %296, %7, %cst_62 {dimension_numbers = #tpu.dot_dimension_numbers<[1], [0], [0], [1], [0, 0, 1, 1], [], []>} : vector<2x32xf32>, vector<32x4xf32>, vector<2x4xf32> -> vector<2x4xf32>
    %298 = arith.addf %297, %11 : vector<2x4xf32>
    %299 = vector.broadcast %264 : vector<2x1xf32> to vector<2x4xf32>
    %300 = vector.broadcast %8 : vector<1x4xf32> to vector<2x4xf32>
    %301 = arith.mulf %299, %300 : vector<2x4xf32>
    %302 = arith.addf %298, %301 : vector<2x4xf32>
    %303 = vector.extract_strided_slice %302 {offsets = [0, 0], sizes = [2, 1], strides = [1, 1]} : vector<2x4xf32> to vector<2x1xf32>
    %304 = arith.negf %303 : vector<2x1xf32>
    %305 = math.exp %304 : vector<2x1xf32>
    %cst_63 = arith.constant 1.000000e+00 : f32
    %306 = vector.broadcast %cst_63 : f32 to vector<2x1xf32>
    %307 = arith.addf %306, %305 : vector<2x1xf32>
    %308 = arith.divf %306, %307 : vector<2x1xf32>
    %309 = vector.extract_strided_slice %302 {offsets = [0, 1], sizes = [2, 1], strides = [1, 1]} : vector<2x4xf32> to vector<2x1xf32>
    %310 = arith.negf %309 : vector<2x1xf32>
    %311 = math.exp %310 : vector<2x1xf32>
    %cst_64 = arith.constant 1.000000e+00 : f32
    %312 = vector.broadcast %cst_64 : f32 to vector<2x1xf32>
    %313 = arith.addf %312, %311 : vector<2x1xf32>
    %314 = arith.divf %312, %313 : vector<2x1xf32>
    %315 = vector.extract_strided_slice %302 {offsets = [0, 2], sizes = [2, 1], strides = [1, 1]} : vector<2x4xf32> to vector<2x1xf32>
    %316 = math.tanh %315 : vector<2x1xf32>
    %317 = vector.extract_strided_slice %302 {offsets = [0, 3], sizes = [2, 1], strides = [1, 1]} : vector<2x4xf32> to vector<2x1xf32>
    %318 = arith.negf %317 : vector<2x1xf32>
    %319 = math.exp %318 : vector<2x1xf32>
    %cst_65 = arith.constant 1.000000e+00 : f32
    %320 = vector.broadcast %cst_65 : f32 to vector<2x1xf32>
    %321 = arith.addf %320, %319 : vector<2x1xf32>
    %322 = arith.divf %320, %321 : vector<2x1xf32>
    %323 = arith.mulf %314, %262 : vector<2x1xf32>
    %324 = arith.mulf %308, %316 : vector<2x1xf32>
    %325 = arith.addf %323, %324 : vector<2x1xf32>
    %326 = math.tanh %325 : vector<2x1xf32>
    %327 = arith.mulf %322, %326 : vector<2x1xf32>
    %328 = vector.broadcast %12 : vector<1x1xf32> to vector<2x1xf32>
    %329 = arith.mulf %327, %328 : vector<2x1xf32>
    %330 = vector.broadcast %13 : vector<1x1xf32> to vector<2x1xf32>
    %331 = arith.addf %329, %330 : vector<2x1xf32>
    %c0_66 = arith.constant 0 : index
    %c4 = arith.constant 4 : index
    %332 = vector.load %arg10[%c0_66, %c4] : memref<2x8xf32, #tpu.memory_space<vmem>>, vector<2x1xf32>
    tpu.vector_store %arg10[%c0_66, %c4], %331 {strides = array<i32>} : memref<2x8xf32, #tpu.memory_space<vmem>>, vector<2x1xf32>,
    %cst_67 = arith.constant dense<0.000000e+00> : vector<2x128xf32>
    %333 = tpu.matmul %296, %6, %cst_67 {dimension_numbers = #tpu.dot_dimension_numbers<[1], [0], [0], [1], [0, 0, 1, 1], [], []>} : vector<2x32xf32>, vector<32x128xf32>, vector<2x128xf32> -> vector<2x128xf32>
    %334 = arith.addf %333, %5 : vector<2x128xf32>
    %335 = vector.extract_strided_slice %334 {offsets = [0, 0], sizes = [2, 32], strides = [1, 1]} : vector<2x128xf32> to vector<2x32xf32>
    %336 = arith.negf %335 : vector<2x32xf32>
    %337 = math.exp %336 : vector<2x32xf32>
    %cst_68 = arith.constant 1.000000e+00 : f32
    %338 = vector.broadcast %cst_68 : f32 to vector<2x32xf32>
    %339 = arith.addf %338, %337 : vector<2x32xf32>
    %340 = arith.divf %338, %339 : vector<2x32xf32>
    %341 = vector.extract_strided_slice %334 {offsets = [0, 32], sizes = [2, 32], strides = [1, 1]} : vector<2x128xf32> to vector<2x32xf32>
    %342 = arith.negf %341 : vector<2x32xf32>
    %343 = math.exp %342 : vector<2x32xf32>
    %cst_69 = arith.constant 1.000000e+00 : f32
    %344 = vector.broadcast %cst_69 : f32 to vector<2x32xf32>
    %345 = arith.addf %344, %343 : vector<2x32xf32>
    %346 = arith.divf %344, %345 : vector<2x32xf32>
    %347 = vector.extract_strided_slice %334 {offsets = [0, 64], sizes = [2, 32], strides = [1, 1]} : vector<2x128xf32> to vector<2x32xf32>
    %348 = math.tanh %347 : vector<2x32xf32>
    %349 = vector.extract_strided_slice %334 {offsets = [0, 96], sizes = [2, 32], strides = [1, 1]} : vector<2x128xf32> to vector<2x32xf32>
    %350 = arith.negf %349 : vector<2x32xf32>
    %351 = math.exp %350 : vector<2x32xf32>
    %cst_70 = arith.constant 1.000000e+00 : f32
    %352 = vector.broadcast %cst_70 : f32 to vector<2x32xf32>
    %353 = arith.addf %352, %351 : vector<2x32xf32>
    %354 = arith.divf %352, %353 : vector<2x32xf32>
    %355 = arith.mulf %346, %294 : vector<2x32xf32>
    %356 = arith.mulf %340, %348 : vector<2x32xf32>
    %357 = arith.addf %355, %356 : vector<2x32xf32>
    %358 = math.tanh %357 : vector<2x32xf32>
    %359 = arith.mulf %354, %358 : vector<2x32xf32>
    %cst_71 = arith.constant dense<0.000000e+00> : vector<2x4xf32>
    %360 = tpu.matmul %359, %7, %cst_71 {dimension_numbers = #tpu.dot_dimension_numbers<[1], [0], [0], [1], [0, 0, 1, 1], [], []>} : vector<2x32xf32>, vector<32x4xf32>, vector<2x4xf32> -> vector<2x4xf32>
    %361 = arith.addf %360, %11 : vector<2x4xf32>
    %362 = vector.broadcast %327 : vector<2x1xf32> to vector<2x4xf32>
    %363 = vector.broadcast %8 : vector<1x4xf32> to vector<2x4xf32>
    %364 = arith.mulf %362, %363 : vector<2x4xf32>
    %365 = arith.addf %361, %364 : vector<2x4xf32>
    %366 = vector.extract_strided_slice %365 {offsets = [0, 0], sizes = [2, 1], strides = [1, 1]} : vector<2x4xf32> to vector<2x1xf32>
    %367 = arith.negf %366 : vector<2x1xf32>
    %368 = math.exp %367 : vector<2x1xf32>
    %cst_72 = arith.constant 1.000000e+00 : f32
    %369 = vector.broadcast %cst_72 : f32 to vector<2x1xf32>
    %370 = arith.addf %369, %368 : vector<2x1xf32>
    %371 = arith.divf %369, %370 : vector<2x1xf32>
    %372 = vector.extract_strided_slice %365 {offsets = [0, 1], sizes = [2, 1], strides = [1, 1]} : vector<2x4xf32> to vector<2x1xf32>
    %373 = arith.negf %372 : vector<2x1xf32>
    %374 = math.exp %373 : vector<2x1xf32>
    %cst_73 = arith.constant 1.000000e+00 : f32
    %375 = vector.broadcast %cst_73 : f32 to vector<2x1xf32>
    %376 = arith.addf %375, %374 : vector<2x1xf32>
    %377 = arith.divf %375, %376 : vector<2x1xf32>
    %378 = vector.extract_strided_slice %365 {offsets = [0, 2], sizes = [2, 1], strides = [1, 1]} : vector<2x4xf32> to vector<2x1xf32>
    %379 = math.tanh %378 : vector<2x1xf32>
    %380 = vector.extract_strided_slice %365 {offsets = [0, 3], sizes = [2, 1], strides = [1, 1]} : vector<2x4xf32> to vector<2x1xf32>
    %381 = arith.negf %380 : vector<2x1xf32>
    %382 = math.exp %381 : vector<2x1xf32>
    %cst_74 = arith.constant 1.000000e+00 : f32
    %383 = vector.broadcast %cst_74 : f32 to vector<2x1xf32>
    %384 = arith.addf %383, %382 : vector<2x1xf32>
    %385 = arith.divf %383, %384 : vector<2x1xf32>
    %386 = arith.mulf %377, %325 : vector<2x1xf32>
    %387 = arith.mulf %371, %379 : vector<2x1xf32>
    %388 = arith.addf %386, %387 : vector<2x1xf32>
    %389 = math.tanh %388 : vector<2x1xf32>
    %390 = arith.mulf %385, %389 : vector<2x1xf32>
    %391 = vector.broadcast %12 : vector<1x1xf32> to vector<2x1xf32>
    %392 = arith.mulf %390, %391 : vector<2x1xf32>
    %393 = vector.broadcast %13 : vector<1x1xf32> to vector<2x1xf32>
    %394 = arith.addf %392, %393 : vector<2x1xf32>
    %c0_75 = arith.constant 0 : index
    %c5 = arith.constant 5 : index
    %395 = vector.load %arg10[%c0_75, %c5] : memref<2x8xf32, #tpu.memory_space<vmem>>, vector<2x1xf32>
    tpu.vector_store %arg10[%c0_75, %c5], %394 {strides = array<i32>} : memref<2x8xf32, #tpu.memory_space<vmem>>, vector<2x1xf32>,
    %cst_76 = arith.constant dense<0.000000e+00> : vector<2x128xf32>
    %396 = tpu.matmul %359, %6, %cst_76 {dimension_numbers = #tpu.dot_dimension_numbers<[1], [0], [0], [1], [0, 0, 1, 1], [], []>} : vector<2x32xf32>, vector<32x128xf32>, vector<2x128xf32> -> vector<2x128xf32>
    %397 = arith.addf %396, %5 : vector<2x128xf32>
    %398 = vector.extract_strided_slice %397 {offsets = [0, 0], sizes = [2, 32], strides = [1, 1]} : vector<2x128xf32> to vector<2x32xf32>
    %399 = arith.negf %398 : vector<2x32xf32>
    %400 = math.exp %399 : vector<2x32xf32>
    %cst_77 = arith.constant 1.000000e+00 : f32
    %401 = vector.broadcast %cst_77 : f32 to vector<2x32xf32>
    %402 = arith.addf %401, %400 : vector<2x32xf32>
    %403 = arith.divf %401, %402 : vector<2x32xf32>
    %404 = vector.extract_strided_slice %397 {offsets = [0, 32], sizes = [2, 32], strides = [1, 1]} : vector<2x128xf32> to vector<2x32xf32>
    %405 = arith.negf %404 : vector<2x32xf32>
    %406 = math.exp %405 : vector<2x32xf32>
    %cst_78 = arith.constant 1.000000e+00 : f32
    %407 = vector.broadcast %cst_78 : f32 to vector<2x32xf32>
    %408 = arith.addf %407, %406 : vector<2x32xf32>
    %409 = arith.divf %407, %408 : vector<2x32xf32>
    %410 = vector.extract_strided_slice %397 {offsets = [0, 64], sizes = [2, 32], strides = [1, 1]} : vector<2x128xf32> to vector<2x32xf32>
    %411 = math.tanh %410 : vector<2x32xf32>
    %412 = vector.extract_strided_slice %397 {offsets = [0, 96], sizes = [2, 32], strides = [1, 1]} : vector<2x128xf32> to vector<2x32xf32>
    %413 = arith.negf %412 : vector<2x32xf32>
    %414 = math.exp %413 : vector<2x32xf32>
    %cst_79 = arith.constant 1.000000e+00 : f32
    %415 = vector.broadcast %cst_79 : f32 to vector<2x32xf32>
    %416 = arith.addf %415, %414 : vector<2x32xf32>
    %417 = arith.divf %415, %416 : vector<2x32xf32>
    %418 = arith.mulf %409, %357 : vector<2x32xf32>
    %419 = arith.mulf %403, %411 : vector<2x32xf32>
    %420 = arith.addf %418, %419 : vector<2x32xf32>
    %421 = math.tanh %420 : vector<2x32xf32>
    %422 = arith.mulf %417, %421 : vector<2x32xf32>
    %cst_80 = arith.constant dense<0.000000e+00> : vector<2x4xf32>
    %423 = tpu.matmul %422, %7, %cst_80 {dimension_numbers = #tpu.dot_dimension_numbers<[1], [0], [0], [1], [0, 0, 1, 1], [], []>} : vector<2x32xf32>, vector<32x4xf32>, vector<2x4xf32> -> vector<2x4xf32>
    %424 = arith.addf %423, %11 : vector<2x4xf32>
    %425 = vector.broadcast %390 : vector<2x1xf32> to vector<2x4xf32>
    %426 = vector.broadcast %8 : vector<1x4xf32> to vector<2x4xf32>
    %427 = arith.mulf %425, %426 : vector<2x4xf32>
    %428 = arith.addf %424, %427 : vector<2x4xf32>
    %429 = vector.extract_strided_slice %428 {offsets = [0, 0], sizes = [2, 1], strides = [1, 1]} : vector<2x4xf32> to vector<2x1xf32>
    %430 = arith.negf %429 : vector<2x1xf32>
    %431 = math.exp %430 : vector<2x1xf32>
    %cst_81 = arith.constant 1.000000e+00 : f32
    %432 = vector.broadcast %cst_81 : f32 to vector<2x1xf32>
    %433 = arith.addf %432, %431 : vector<2x1xf32>
    %434 = arith.divf %432, %433 : vector<2x1xf32>
    %435 = vector.extract_strided_slice %428 {offsets = [0, 1], sizes = [2, 1], strides = [1, 1]} : vector<2x4xf32> to vector<2x1xf32>
    %436 = arith.negf %435 : vector<2x1xf32>
    %437 = math.exp %436 : vector<2x1xf32>
    %cst_82 = arith.constant 1.000000e+00 : f32
    %438 = vector.broadcast %cst_82 : f32 to vector<2x1xf32>
    %439 = arith.addf %438, %437 : vector<2x1xf32>
    %440 = arith.divf %438, %439 : vector<2x1xf32>
    %441 = vector.extract_strided_slice %428 {offsets = [0, 2], sizes = [2, 1], strides = [1, 1]} : vector<2x4xf32> to vector<2x1xf32>
    %442 = math.tanh %441 : vector<2x1xf32>
    %443 = vector.extract_strided_slice %428 {offsets = [0, 3], sizes = [2, 1], strides = [1, 1]} : vector<2x4xf32> to vector<2x1xf32>
    %444 = arith.negf %443 : vector<2x1xf32>
    %445 = math.exp %444 : vector<2x1xf32>
    %cst_83 = arith.constant 1.000000e+00 : f32
    %446 = vector.broadcast %cst_83 : f32 to vector<2x1xf32>
    %447 = arith.addf %446, %445 : vector<2x1xf32>
    %448 = arith.divf %446, %447 : vector<2x1xf32>
    %449 = arith.mulf %440, %388 : vector<2x1xf32>
    %450 = arith.mulf %434, %442 : vector<2x1xf32>
    %451 = arith.addf %449, %450 : vector<2x1xf32>
    %452 = math.tanh %451 : vector<2x1xf32>
    %453 = arith.mulf %448, %452 : vector<2x1xf32>
    %454 = vector.broadcast %12 : vector<1x1xf32> to vector<2x1xf32>
    %455 = arith.mulf %453, %454 : vector<2x1xf32>
    %456 = vector.broadcast %13 : vector<1x1xf32> to vector<2x1xf32>
    %457 = arith.addf %455, %456 : vector<2x1xf32>
    %c0_84 = arith.constant 0 : index
    %c6 = arith.constant 6 : index
    %458 = vector.load %arg10[%c0_84, %c6] : memref<2x8xf32, #tpu.memory_space<vmem>>, vector<2x1xf32>
    tpu.vector_store %arg10[%c0_84, %c6], %457 {strides = array<i32>} : memref<2x8xf32, #tpu.memory_space<vmem>>, vector<2x1xf32>,
    %cst_85 = arith.constant dense<0.000000e+00> : vector<2x128xf32>
    %459 = tpu.matmul %422, %6, %cst_85 {dimension_numbers = #tpu.dot_dimension_numbers<[1], [0], [0], [1], [0, 0, 1, 1], [], []>} : vector<2x32xf32>, vector<32x128xf32>, vector<2x128xf32> -> vector<2x128xf32>
    %460 = arith.addf %459, %5 : vector<2x128xf32>
    %461 = vector.extract_strided_slice %460 {offsets = [0, 0], sizes = [2, 32], strides = [1, 1]} : vector<2x128xf32> to vector<2x32xf32>
    %462 = arith.negf %461 : vector<2x32xf32>
    %463 = math.exp %462 : vector<2x32xf32>
    %cst_86 = arith.constant 1.000000e+00 : f32
    %464 = vector.broadcast %cst_86 : f32 to vector<2x32xf32>
    %465 = arith.addf %464, %463 : vector<2x32xf32>
    %466 = arith.divf %464, %465 : vector<2x32xf32>
    %467 = vector.extract_strided_slice %460 {offsets = [0, 32], sizes = [2, 32], strides = [1, 1]} : vector<2x128xf32> to vector<2x32xf32>
    %468 = arith.negf %467 : vector<2x32xf32>
    %469 = math.exp %468 : vector<2x32xf32>
    %cst_87 = arith.constant 1.000000e+00 : f32
    %470 = vector.broadcast %cst_87 : f32 to vector<2x32xf32>
    %471 = arith.addf %470, %469 : vector<2x32xf32>
    %472 = arith.divf %470, %471 : vector<2x32xf32>
    %473 = vector.extract_strided_slice %460 {offsets = [0, 64], sizes = [2, 32], strides = [1, 1]} : vector<2x128xf32> to vector<2x32xf32>
    %474 = math.tanh %473 : vector<2x32xf32>
    %475 = vector.extract_strided_slice %460 {offsets = [0, 96], sizes = [2, 32], strides = [1, 1]} : vector<2x128xf32> to vector<2x32xf32>
    %476 = arith.negf %475 : vector<2x32xf32>
    %477 = math.exp %476 : vector<2x32xf32>
    %cst_88 = arith.constant 1.000000e+00 : f32
    %478 = vector.broadcast %cst_88 : f32 to vector<2x32xf32>
    %479 = arith.addf %478, %477 : vector<2x32xf32>
    %480 = arith.divf %478, %479 : vector<2x32xf32>
    %481 = arith.mulf %472, %420 : vector<2x32xf32>
    %482 = arith.mulf %466, %474 : vector<2x32xf32>
    %483 = arith.addf %481, %482 : vector<2x32xf32>
    %484 = math.tanh %483 : vector<2x32xf32>
    %485 = arith.mulf %480, %484 : vector<2x32xf32>
    %cst_89 = arith.constant dense<0.000000e+00> : vector<2x4xf32>
    %486 = tpu.matmul %485, %7, %cst_89 {dimension_numbers = #tpu.dot_dimension_numbers<[1], [0], [0], [1], [0, 0, 1, 1], [], []>} : vector<2x32xf32>, vector<32x4xf32>, vector<2x4xf32> -> vector<2x4xf32>
    %487 = arith.addf %486, %11 : vector<2x4xf32>
    %488 = vector.broadcast %453 : vector<2x1xf32> to vector<2x4xf32>
    %489 = vector.broadcast %8 : vector<1x4xf32> to vector<2x4xf32>
    %490 = arith.mulf %488, %489 : vector<2x4xf32>
    %491 = arith.addf %487, %490 : vector<2x4xf32>
    %492 = vector.extract_strided_slice %491 {offsets = [0, 0], sizes = [2, 1], strides = [1, 1]} : vector<2x4xf32> to vector<2x1xf32>
    %493 = arith.negf %492 : vector<2x1xf32>
    %494 = math.exp %493 : vector<2x1xf32>
    %cst_90 = arith.constant 1.000000e+00 : f32
    %495 = vector.broadcast %cst_90 : f32 to vector<2x1xf32>
    %496 = arith.addf %495, %494 : vector<2x1xf32>
    %497 = arith.divf %495, %496 : vector<2x1xf32>
    %498 = vector.extract_strided_slice %491 {offsets = [0, 1], sizes = [2, 1], strides = [1, 1]} : vector<2x4xf32> to vector<2x1xf32>
    %499 = arith.negf %498 : vector<2x1xf32>
    %500 = math.exp %499 : vector<2x1xf32>
    %cst_91 = arith.constant 1.000000e+00 : f32
    %501 = vector.broadcast %cst_91 : f32 to vector<2x1xf32>
    %502 = arith.addf %501, %500 : vector<2x1xf32>
    %503 = arith.divf %501, %502 : vector<2x1xf32>
    %504 = vector.extract_strided_slice %491 {offsets = [0, 2], sizes = [2, 1], strides = [1, 1]} : vector<2x4xf32> to vector<2x1xf32>
    %505 = math.tanh %504 : vector<2x1xf32>
    %506 = vector.extract_strided_slice %491 {offsets = [0, 3], sizes = [2, 1], strides = [1, 1]} : vector<2x4xf32> to vector<2x1xf32>
    %507 = arith.negf %506 : vector<2x1xf32>
    %508 = math.exp %507 : vector<2x1xf32>
    %cst_92 = arith.constant 1.000000e+00 : f32
    %509 = vector.broadcast %cst_92 : f32 to vector<2x1xf32>
    %510 = arith.addf %509, %508 : vector<2x1xf32>
    %511 = arith.divf %509, %510 : vector<2x1xf32>
    %512 = arith.mulf %503, %451 : vector<2x1xf32>
    %513 = arith.mulf %497, %505 : vector<2x1xf32>
    %514 = arith.addf %512, %513 : vector<2x1xf32>
    %515 = math.tanh %514 : vector<2x1xf32>
    %516 = arith.mulf %511, %515 : vector<2x1xf32>
    %517 = vector.broadcast %12 : vector<1x1xf32> to vector<2x1xf32>
    %518 = arith.mulf %516, %517 : vector<2x1xf32>
    %519 = vector.broadcast %13 : vector<1x1xf32> to vector<2x1xf32>
    %520 = arith.addf %518, %519 : vector<2x1xf32>
    %c0_93 = arith.constant 0 : index
    %c7 = arith.constant 7 : index
    %521 = vector.load %arg10[%c0_93, %c7] : memref<2x8xf32, #tpu.memory_space<vmem>>, vector<2x1xf32>
    tpu.vector_store %arg10[%c0_93, %c7], %520 {strides = array<i32>} : memref<2x8xf32, #tpu.memory_space<vmem>>, vector<2x1xf32>,
    return
  }
  func.func @transform_0(%arg0: i32) -> (i32, i32) {
    %c0_i32 = arith.constant 0 : i32
    %c0_i32_0 = arith.constant 0 : i32
    return %arg0, %c0_i32 : i32, i32
  }
  func.func @transform_1(%arg0: i32) -> (i32, i32) {
    %c0_i32 = arith.constant 0 : i32
    %c0_i32_0 = arith.constant 0 : i32
    %c0_i32_1 = arith.constant 0 : i32
    return %c0_i32, %c0_i32_0 : i32, i32
  }
  func.func @transform_2(%arg0: i32) -> (i32, i32) {
    %c0_i32 = arith.constant 0 : i32
    %c0_i32_0 = arith.constant 0 : i32
    %c0_i32_1 = arith.constant 0 : i32
    return %c0_i32, %c0_i32_0 : i32, i32
  }
  func.func @transform_3(%arg0: i32) -> (i32, i32) {
    %c0_i32 = arith.constant 0 : i32
    %c0_i32_0 = arith.constant 0 : i32
    %c0_i32_1 = arith.constant 0 : i32
    return %c0_i32, %c0_i32_0 : i32, i32
  }
  func.func @transform_4(%arg0: i32) -> (i32, i32) {
    %c0_i32 = arith.constant 0 : i32
    %c0_i32_0 = arith.constant 0 : i32
    %c0_i32_1 = arith.constant 0 : i32
    return %c0_i32, %c0_i32_0 : i32, i32
  }
  func.func @transform_5(%arg0: i32) -> (i32, i32) {
    %c0_i32 = arith.constant 0 : i32
    %c0_i32_0 = arith.constant 0 : i32
    %c0_i32_1 = arith.constant 0 : i32
    return %c0_i32, %c0_i32_0 : i32, i32
  }
  func.func @transform_6(%arg0: i32) -> (i32, i32) {
    %c0_i32 = arith.constant 0 : i32
    %c0_i32_0 = arith.constant 0 : i32
    %c0_i32_1 = arith.constant 0 : i32
    return %c0_i32, %c0_i32_0 : i32, i32
  }
  func.func @transform_7(%arg0: i32) -> (i32, i32) {
    %c0_i32 = arith.constant 0 : i32
    %c0_i32_0 = arith.constant 0 : i32
    %c0_i32_1 = arith.constant 0 : i32
    return %c0_i32, %c0_i32_0 : i32, i32
  }
  func.func @transform_8(%arg0: i32) -> (i32, i32) {
    %c0_i32 = arith.constant 0 : i32
    %c0_i32_0 = arith.constant 0 : i32
    %c0_i32_1 = arith.constant 0 : i32
    return %c0_i32, %c0_i32_0 : i32, i32
  }
  func.func @transform_9(%arg0: i32) -> (i32, i32) {
    %c0_i32 = arith.constant 0 : i32
    %c0_i32_0 = arith.constant 0 : i32
    return %arg0, %c0_i32 : i32, i32
  }
}

</mosaic_0001>

<llo_original>
// kernel: tpu_custom_call.1
$region0: #{tpu_custom_call.1}
  #allocation0 [shape = 'u32[]', space=smem, size = 0x4, offset = 0x4, fixed_abs, tag = 'smem constant byte address 0x4 - core index']
  #allocation1 [shape = 'u32[144,128]{1,0:T(1,128)}', space=vmem, size = 0x12000, scoped, tag = 'internal scratch']
  #allocation2 [shape = 'f32[1,1]{1,0:T(1,128)S(1)}', space=vmem, size = 0x200, scoped, tag = 'scoped memory for tpu_custom_call.1']
  #allocation3 [shape = 'f32[1,1]{1,0:T(1,128)S(1)}', space=vmem, size = 0x200, scoped, tag = 'scoped memory for tpu_custom_call.1']
  %s0 = inlined_call_operand.vmem [shape: f32[2,16], index: 0, kind: input, shape index: {}]
  %s1 = inlined_call_operand.hbm [shape: f32[16,128], index: 1, kind: input, shape index: {}]
  %s2 = inlined_call_operand.vmem [shape: f32[32,128], index: 2, kind: input, shape index: {}]
  %s3 = inlined_call_operand.vmem [shape: f32[1,128], index: 3, kind: input, shape index: {}]
  %s4 = inlined_call_operand.vmem [shape: f32[32,4], index: 4, kind: input, shape index: {}]
  %s5 = inlined_call_operand.vmem [shape: f32[1,4], index: 5, kind: input, shape index: {}]
  %s6 = inlined_call_operand.vmem [shape: f32[1,4], index: 6, kind: input, shape index: {}]
  %s7 = inlined_call_operand.<no memory space> [shape: f32[1,1], index: 7, kind: input, shape index: {}]
  %s8 = inlined_call_operand.<no memory space> [shape: f32[1,1], index: 8, kind: input, shape index: {}]
  %s9 = inlined_call_operand.hbm [shape: f32[2,8], index: 9, kind: output, shape index: {}]
  %s10 = sld [smem:[#allocation0]]
  $region50: #{tpu_custom_call.1} parent=0
    _
  %s12 = ssub.s32 1, %s10
  %s13 = scalar_select 0, %s12, %s10
  %v14 = vstv %s7
  %15 = vst [vmem:[#allocation2] sm:$0x1] %v14
  %v16 = vstv %s8
  %17 = vst [vmem:[#allocation3] sm:$0x1] %v16
  $region1: #{tpu_custom_call.1} parent=0
    #allocation4 [shape = 'u8[8192]{0}', space=vmem, size = 0x2000, scoped, tag = 'input window, operand 1, single buffered']
    #allocation5 [shape = 's32[1]{0}', space=sflag, size = 0x4, scoped, tag = 'scoped memory for tpu_custom_call.1']
    #allocation6 [shape = 's32[1]{0}', space=sflag, size = 0x4, scoped, tag = 'scoped memory for tpu_custom_call.1']
    #allocation7 [shape = 'u8[1024]{0}', space=vmem, size = 0x400, scoped, tag = 'output window, operand 0, single buffered']
    %18 = vsyncpa [#allocation5], 0
    %19 = vsyncpa [#allocation6], 0
    // Predicated region
    $region2: #{tpu_custom_call.1} parent=1 // pred_check
      _
    $region3: #{tpu_custom_call.1} parent=1 // pred_check_branch
      %21 = sbr.rel (0) target = $region5
    $region4: #{tpu_custom_call.1} parent=1 // pred_region
      _
    $region5: #{tpu_custom_call.1} parent=1 // pred_fallthru
      _
    // Predicated region
    $region6: #{tpu_custom_call.1} parent=1 // pred_check
      _
    $region7: #{tpu_custom_call.1} parent=1 // pred_check_branch
      %23 = sbr.rel (0) target = $region9
    $region8: #{tpu_custom_call.1} parent=1 // pred_region
      %s25 = ssub.s32 256, 256
      %26 = vsyncadd [#allocation5], %s25
      %s27 = sshll.u32 [#allocation4], 4
      %s28 = int_to_ptr.vmem [resolvable:$true] %s27
      %33 = dma.hbm_to_vmem [thread:$0]  %s1, 256, %s28, [#allocation5], 128, 128, 8
    $region9: #{tpu_custom_call.1} parent=1 // pred_fallthru
      _
    // Predicated region
    $region10: #{tpu_custom_call.1} parent=1 // pred_check
      _
    $region11: #{tpu_custom_call.1} parent=1 // pred_check_branch
      %35 = sbr.rel (0) target = $region13
    $region12: #{tpu_custom_call.1} parent=1 // pred_region
      _
    $region13: #{tpu_custom_call.1} parent=1 // pred_fallthru
      _
    // Predicated region
    $region14: #{tpu_custom_call.1} parent=1 // pred_check
      _
    $region15: #{tpu_custom_call.1} parent=1 // pred_check_branch
      %37 = sbr.rel (0) target = $region17
    $region16: #{tpu_custom_call.1} parent=1 // pred_region
      _
    $region17: #{tpu_custom_call.1} parent=1 // pred_fallthru
      _
    // Predicated region
    $region18: #{tpu_custom_call.1} parent=1 // pred_check
      _
    $region19: #{tpu_custom_call.1} parent=1 // pred_check_branch
      %39 = sbr.rel (0) target = $region21
    $region20: #{tpu_custom_call.1} parent=1 // pred_region
      _
    $region21: #{tpu_custom_call.1} parent=1 // pred_fallthru
      _
    // Predicated region
    $region22: #{tpu_custom_call.1} parent=1 // pred_check
      _
    $region23: #{tpu_custom_call.1} parent=1 // pred_check_branch
      %41 = sbr.rel (0) target = $region25
    $region24: #{tpu_custom_call.1} parent=1 // pred_region
      _
    $region25: #{tpu_custom_call.1} parent=1 // pred_fallthru
      _
    // Predicated region
    $region26: #{tpu_custom_call.1} parent=1 // pred_check
      _
    $region27: #{tpu_custom_call.1} parent=1 // pred_check_branch
      %43 = sbr.rel (0) target = $region29
    $region28: #{tpu_custom_call.1} parent=1 // pred_region
      _
    $region29: #{tpu_custom_call.1} parent=1 // pred_fallthru
      _
    // Predicated region
    $region30: #{tpu_custom_call.1} parent=1 // pred_check
      _
    $region31: #{tpu_custom_call.1} parent=1 // pred_check_branch
      %45 = sbr.rel (0) target = $region33
    $region32: #{tpu_custom_call.1} parent=1 // pred_region
      _
    $region33: #{tpu_custom_call.1} parent=1 // pred_fallthru
      _
    // Predicated region
    $region34: #{tpu_custom_call.1} parent=1 // pred_check
      _
    $region35: #{tpu_custom_call.1} parent=1 // pred_check_branch
      %47 = sbr.rel (0) target = $region37
    $region36: #{tpu_custom_call.1} parent=1 // pred_region
      _
    $region37: #{tpu_custom_call.1} parent=1 // pred_fallthru
      _
    // Predicated region
    $region38: #{tpu_custom_call.1} parent=1 // pred_check
      _
    $region39: #{tpu_custom_call.1} parent=1 // pred_check_branch
      %49 = sbr.rel (0) target = $region41
    $region40: #{tpu_custom_call.1} parent=1 // pred_region
      %50 = dma.done [#allocation5], 256
    $region41: #{tpu_custom_call.1} parent=1 // pred_fallthru
      _
    %v51 = vld [vmem:[%s0] sm:$0x3]
    %v52 = vld [vmem:[#allocation4] sm:$0xff]
    %v53 = vld [vmem:[#allocation4 + $0x8] sm:$0xff]
    %v54 = vld [vmem:[%s3] sm:$0x1]
    %v56 = vlaneseq
    %v57 = vshrl.u32 %v56, 7
    %v58 = vsub.s32 0, %v57
    %v59 = vrot.slane %v54, %v58
    %vm61 = vcmask 130048
    %v63 = vsel %vm61, %v51, 0
    %65 = vmatprep.subr.mxu0 0.0
    %66 = vmatpush1.msra.mxu0 0.0
    %67 = vmatprep.subr.mxu0 0.0
    %68 = vmatpush1.msra.mxu0 0.0
    %69 = vmatprep.subr.mxu0 0.0
    %70 = vmatpush1.msra.mxu0 0.0
    %71 = vmatprep.subr.mxu0 0.0
    %72 = vmatpush1.msra.mxu0 0.0
    %73 = vmatprep.subr.mxu0 0.0
    %74 = vmatpush1.msra.mxu0 0.0
    %75 = vmatprep.subr.mxu0 0.0
    %76 = vmatpush1.msra.mxu0 0.0
    %77 = vmatprep.subr.mxu0 0.0
    %78 = vmatpush1.msra.mxu0 0.0
    %79 = vmatprep.subr.mxu0 0.0
    %80 = vmatpush1.msra.mxu0 0.0
    %81 = vmatprep.subr.mxu0 0.0
    %82 = vmatpush1.msra.mxu0 0.0
    %83 = vmatprep.subr.mxu0 0.0
    %84 = vmatpush1.msra.mxu0 0.0
    %85 = vmatprep.subr.mxu0 0.0
    %86 = vmatpush1.msra.mxu0 0.0
    %87 = vmatprep.subr.mxu0 0.0
    %88 = vmatpush1.msra.mxu0 0.0
    %89 = vmatprep.subr.mxu0 0.0
    %90 = vmatpush1.msra.mxu0 0.0
    %91 = vmatprep.subr.mxu0 0.0
    %92 = vmatpush1.msra.mxu0 0.0
    %93 = vmatprep.subr.mxu0 0.0
    %94 = vmatpush1.msra.mxu0 %v53
    %95 = vmatprep.subr.mxu0 0.0
    %96 = vmatpush1.msra.mxu0 %v52
    %97 = vmatprep.subr.mxu0 0.0
    %98 = vmatpush2.msra.mxu0 0.0
    %99 = vmatprep.subr.mxu0 0.0
    %100 = vmatpush2.msra.mxu0 0.0
    %101 = vmatprep.subr.mxu0 0.0
    %102 = vmatpush2.msra.mxu0 0.0
    %103 = vmatprep.subr.mxu0 0.0
    %104 = vmatpush2.msra.mxu0 0.0
    %105 = vmatprep.subr.mxu0 0.0
    %106 = vmatpush2.msra.mxu0 0.0
    %107 = vmatprep.subr.mxu0 0.0
    %108 = vmatpush2.msra.mxu0 0.0
    %109 = vmatprep.subr.mxu0 0.0
    %110 = vmatpush2.msra.mxu0 0.0
    %111 = vmatprep.subr.mxu0 0.0
    %112 = vmatpush2.msra.mxu0 0.0
    %113 = vmatprep.subr.mxu0 0.0
    %114 = vmatpush2.msra.mxu0 0.0
    %115 = vmatprep.subr.mxu0 0.0
    %116 = vmatpush2.msra.mxu0 0.0
    %117 = vmatprep.subr.mxu0 0.0
    %118 = vmatpush2.msra.mxu0 0.0
    %119 = vmatprep.subr.mxu0 0.0
    %120 = vmatpush2.msra.mxu0 0.0
    %121 = vmatprep.subr.mxu0 0.0
    %122 = vmatpush2.msra.mxu0 0.0
    %123 = vmatprep.subr.mxu0 0.0
    %124 = vmatpush2.msra.mxu0 0.0
    %125 = vmatprep.subr.mxu0 0.0
    %126 = vmatpush2.msra.mxu0 0.0
    %127 = vmatprep.subr.mxu0 0.0
    %128 = vmatpush2.msra.mxu0 0.0
    %129 = vmatprep.mubr.f32.mxu0 0.0
    %130 = vmatmul.mubr.f32.gmra.mxu0 %v63
    %v131 = vpop.f32.mrf.mxu0
    %v132 = vadd.f32 %v59, %v131
    %v133 = vpop.f32.mrf.mxu0
    %134 = vdwg.mxu0
    %v135 = vld [vmem:[%s2] sm:$0xff]
    %v136 = vld [vmem:[%s2 + $0x8] sm:$0xff]
    %v137 = vld [vmem:[%s2 + $0x10] sm:$0xff]
    %v138 = vld [vmem:[%s2 + $0x18] sm:$0xff]
    %v139 = vld [vmem:[%s4] sm:$0xff]
    %v140 = vld [vmem:[%s4 + $0x8] sm:$0xff]
    %v141 = vld [vmem:[%s4 + $0x10] sm:$0xff]
    %v142 = vld [vmem:[%s4 + $0x18] sm:$0xff]
    %v143 = vld [vmem:[%s5] sm:$0x1]
    %v144 = vld [vmem:[%s6] sm:$0x1]
    %v146 = vlaneseq
    %v147 = vshrl.u32 %v146, 7
    %v148 = vsub.s32 0, %v147
    %v149 = vrot.slane %v144, %v148
    %v151 = vld [vmem:[#allocation2] sm:$0x1]
    %v152 = vld [vmem:[#allocation3] sm:$0x1]
    %vm153 = vcmask 261120
    %v155 = vsel %vm153, 0.0, 0
    %157 = vmatprep.subr.mxu0 0.0
    %158 = vmatpush1.msra.mxu0 0.0
    %159 = vmatprep.subr.mxu0 0.0
    %160 = vmatpush1.msra.mxu0 0.0
    %161 = vmatprep.subr.mxu0 0.0
    %162 = vmatpush1.msra.mxu0 0.0
    %163 = vmatprep.subr.mxu0 0.0
    %164 = vmatpush1.msra.mxu0 0.0
    %165 = vmatprep.subr.mxu0 0.0
    %166 = vmatpush1.msra.mxu0 0.0
    %167 = vmatprep.subr.mxu0 0.0
    %168 = vmatpush1.msra.mxu0 0.0
    %169 = vmatprep.subr.mxu0 0.0
    %170 = vmatpush1.msra.mxu0 0.0
    %171 = vmatprep.subr.mxu0 0.0
    %172 = vmatpush1.msra.mxu0 0.0
    %173 = vmatprep.subr.mxu0 0.0
    %174 = vmatpush1.msra.mxu0 0.0
    %175 = vmatprep.subr.mxu0 0.0
    %176 = vmatpush1.msra.mxu0 0.0
    %177 = vmatprep.subr.mxu0 0.0
    %178 = vmatpush1.msra.mxu0 0.0
    %179 = vmatprep.subr.mxu0 0.0
    %180 = vmatpush1.msra.mxu0 0.0
    %181 = vmatprep.subr.mxu0 0.0
    %182 = vmatpush1.msra.mxu0 %v138
    %183 = vmatprep.subr.mxu0 0.0
    %184 = vmatpush1.msra.mxu0 %v137
    %185 = vmatprep.subr.mxu0 0.0
    %186 = vmatpush1.msra.mxu0 %v136
    %187 = vmatprep.subr.mxu0 0.0
    %188 = vmatpush1.msra.mxu0 %v135
    %189 = vmatprep.subr.mxu0 0.0
    %190 = vmatpush2.msra.mxu0 0.0
    %191 = vmatprep.subr.mxu0 0.0
    %192 = vmatpush2.msra.mxu0 0.0
    %193 = vmatprep.subr.mxu0 0.0
    %194 = vmatpush2.msra.mxu0 0.0
    %195 = vmatprep.subr.mxu0 0.0
    %196 = vmatpush2.msra.mxu0 0.0
    %197 = vmatprep.subr.mxu0 0.0
    %198 = vmatpush2.msra.mxu0 0.0
    %199 = vmatprep.subr.mxu0 0.0
    %200 = vmatpush2.msra.mxu0 0.0
    %201 = vmatprep.subr.mxu0 0.0
    %202 = vmatpush2.msra.mxu0 0.0
    %203 = vmatprep.subr.mxu0 0.0
    %204 = vmatpush2.msra.mxu0 0.0
    %205 = vmatprep.subr.mxu0 0.0
    %206 = vmatpush2.msra.mxu0 0.0
    %207 = vmatprep.subr.mxu0 0.0
    %208 = vmatpush2.msra.mxu0 0.0
    %209 = vmatprep.subr.mxu0 0.0
    %210 = vmatpush2.msra.mxu0 0.0
    %211 = vmatprep.subr.mxu0 0.0
    %212 = vmatpush2.msra.mxu0 0.0
    %213 = vmatprep.subr.mxu0 0.0
    %214 = vmatpush2.msra.mxu0 0.0
    %215 = vmatprep.subr.mxu0 0.0
    %216 = vmatpush2.msra.mxu0 0.0
    %217 = vmatprep.subr.mxu0 0.0
    %218 = vmatpush2.msra.mxu0 0.0
    %219 = vmatprep.subr.mxu0 0.0
    %220 = vmatpush2.msra.mxu0 0.0
    %221 = vmatprep.mubr.f32.mxu0 0.0
    %222 = vmatmul.mubr.f32.gmra.mxu0 %v155
    %v223 = vpop.f32.mrf.mxu0
    %v224 = vadd.f32 %v132, %v223
    %v225 = vpop.f32.mrf.mxu0
    %226 = vdwg.mxu0
    %v227 = vxor.u32 %v224, 2147483648
    %v228 = vmul.f32 %v227, 1.442695
    %v229 = vpow.pop %v228
    %v230 = vadd.f32 %v229, 1.0
    %v231 = vrcp.pop %v230
    %v232 = vmul.f32 1.0, %v231
    %v233 = vtanh.pop %v224
    %v234 = vmul.f32 %v232, 0.0
    %236 = vrot.lane.b32.xlu0 %v233, 64
    %v237 = vpop.permute.xlu0 %236
    %v239 = vmul.f32 %v232, %v237
    %241 = vrot.lane.b32.xlu0 %v239, 32
    %v242 = vpop.permute.xlu0 %241
    %v244 = vadd.f32 %v234, %v242
    %v245 = vtanh.pop %v244
    %247 = vrot.lane.b32.xlu0 %v245, 64
    %v248 = vpop.permute.xlu0 %247
    %v250 = vmul.f32 %v232, %v248
    %252 = vrot.lane.b32.xlu0 %v250, 32
    %v253 = vpop.permute.xlu0 %252
    %v254 = vsel %vm153, %v253, 0
    %256 = vmatprep.subr.mxu0 0.0
    %257 = vmatpush1.msra.mxu0 0.0
    %258 = vmatprep.subr.mxu0 0.0
    %259 = vmatpush1.msra.mxu0 0.0
    %260 = vmatprep.subr.mxu0 0.0
    %261 = vmatpush1.msra.mxu0 0.0
    %262 = vmatprep.subr.mxu0 0.0
    %263 = vmatpush1.msra.mxu0 0.0
    %264 = vmatprep.subr.mxu0 0.0
    %265 = vmatpush1.msra.mxu0 0.0
    %266 = vmatprep.subr.mxu0 0.0
    %267 = vmatpush1.msra.mxu0 0.0
    %268 = vmatprep.subr.mxu0 0.0
    %269 = vmatpush1.msra.mxu0 0.0
    %270 = vmatprep.subr.mxu0 0.0
    %271 = vmatpush1.msra.mxu0 0.0
    %272 = vmatprep.subr.mxu0 0.0
    %273 = vmatpush1.msra.mxu0 0.0
    %274 = vmatprep.subr.mxu0 0.0
    %275 = vmatpush1.msra.mxu0 0.0
    %276 = vmatprep.subr.mxu0 0.0
    %277 = vmatpush1.msra.mxu0 0.0
    %278 = vmatprep.subr.mxu0 0.0
    %279 = vmatpush1.msra.mxu0 0.0
    %280 = vmatprep.subr.mxu0 0.0
    %281 = vmatpush1.msra.mxu0 %v142
    %282 = vmatprep.subr.mxu0 0.0
    %283 = vmatpush1.msra.mxu0 %v141
    %284 = vmatprep.subr.mxu0 0.0
    %285 = vmatpush1.msra.mxu0 %v140
    %286 = vmatprep.subr.mxu0 0.0
    %287 = vmatpush1.msra.mxu0 %v139
    %288 = vmatprep.subr.mxu0 0.0
    %289 = vmatpush2.msra.mxu0 0.0
    %290 = vmatprep.subr.mxu0 0.0
    %291 = vmatpush2.msra.mxu0 0.0
    %292 = vmatprep.subr.mxu0 0.0
    %293 = vmatpush2.msra.mxu0 0.0
    %294 = vmatprep.subr.mxu0 0.0
    %295 = vmatpush2.msra.mxu0 0.0
    %296 = vmatprep.subr.mxu0 0.0
    %297 = vmatpush2.msra.mxu0 0.0
    %298 = vmatprep.subr.mxu0 0.0
    %299 = vmatpush2.msra.mxu0 0.0
    %300 = vmatprep.subr.mxu0 0.0
    %301 = vmatpush2.msra.mxu0 0.0
    %302 = vmatprep.subr.mxu0 0.0
    %303 = vmatpush2.msra.mxu0 0.0
    %304 = vmatprep.subr.mxu0 0.0
    %305 = vmatpush2.msra.mxu0 0.0
    %306 = vmatprep.subr.mxu0 0.0
    %307 = vmatpush2.msra.mxu0 0.0
    %308 = vmatprep.subr.mxu0 0.0
    %309 = vmatpush2.msra.mxu0 0.0
    %310 = vmatprep.subr.mxu0 0.0
    %311 = vmatpush2.msra.mxu0 0.0
    %312 = vmatprep.subr.mxu0 0.0
    %313 = vmatpush2.msra.mxu0 0.0
    %314 = vmatprep.subr.mxu0 0.0
    %315 = vmatpush2.msra.mxu0 0.0
    %316 = vmatprep.subr.mxu0 0.0
    %317 = vmatpush2.msra.mxu0 0.0
    %318 = vmatprep.subr.mxu0 0.0
    %319 = vmatpush2.msra.mxu0 0.0
    %320 = vmatprep.mubr.f32.mxu0 0.0
    %321 = vmatmul.mubr.f32.gmra.mxu0 %v254
    %v322 = vpop.f32.mrf.mxu0
    %v323 = vadd.f32 %v149, %v322
    %v324 = vpop.f32.mrf.mxu0
    %325 = vdwg.mxu0
    %v327 = vlaneseq
    %v328 = vshrl.u32 %v327, 7
    %v329 = vsub.s32 0, %v328
    %v330 = vrot.slane %v143, %v329
    %v332 = vmul.f32 %v330, 0.0
    %v333 = vadd.f32 %v323, %v332
    %v334 = vxor.u32 %v333, 2147483648
    %v335 = vmul.f32 %v334, 1.442695
    %v336 = vpow.pop %v335
    %v337 = vadd.f32 %v336, 1.0
    %v338 = vrcp.pop %v337
    %v339 = vmul.f32 1.0, %v338
    %v340 = vtanh.pop %v333
    %v341 = vmul.f32 %v339, 0.0
    %343 = vrot.lane.b32.xlu0 %v340, 126
    %v344 = vpop.permute.xlu0 %343
    %v346 = vmul.f32 %v339, %v344
    %348 = vrot.lane.b32.xlu0 %v346, 1
    %v349 = vpop.permute.xlu0 %348
    %v351 = vadd.f32 %v341, %v349
    %v352 = vtanh.pop %v351
    %354 = vrot.lane.b32.xlu0 %v352, 2
    %v355 = vpop.permute.xlu0 %354
    %v357 = vmul.f32 %v339, %v355
    %v359 = vlaneseq
    %v360 = vshrl.u32 %v359, 7
    %v361 = vsub.s32 0, %v360
    %v362 = vrot.slane %v151, %v361
    %363 = vrot.lane.b32.xlu0 %v362, 3
    %v364 = vpop.permute.xlu0 %363
    %v366 = vmul.f32 %v357, %v364
    %v368 = vlaneseq
    %v369 = vshrl.u32 %v368, 7
    %v370 = vsub.s32 0, %v369
    %v371 = vrot.slane %v152, %v370
    %372 = vrot.lane.b32.xlu0 %v371, 3
    %v373 = vpop.permute.xlu0 %372
    %v375 = vadd.f32 %v366, %v373
    %377 = vrot.lane.b32.xlu0 %v375, 125
    %v378 = vpop.permute.xlu0 %377
    %vm380 = vcmask 1024
    %381 = vst.msk [vmem:[#allocation7] sm:$0x3] %vm380, %v378
    %382 = vmatprep.subr.mxu0 0.0
    %383 = vmatpush1.msra.mxu0 0.0
    %384 = vmatprep.subr.mxu0 0.0
    %385 = vmatpush1.msra.mxu0 0.0
    %386 = vmatprep.subr.mxu0 0.0
    %387 = vmatpush1.msra.mxu0 0.0
    %388 = vmatprep.subr.mxu0 0.0
    %389 = vmatpush1.msra.mxu0 0.0
    %390 = vmatprep.subr.mxu0 0.0
    %391 = vmatpush1.msra.mxu0 0.0
    %392 = vmatprep.subr.mxu0 0.0
    %393 = vmatpush1.msra.mxu0 0.0
    %394 = vmatprep.subr.mxu0 0.0
    %395 = vmatpush1.msra.mxu0 0.0
    %396 = vmatprep.subr.mxu0 0.0
    %397 = vmatpush1.msra.mxu0 0.0
    %398 = vmatprep.subr.mxu0 0.0
    %399 = vmatpush1.msra.mxu0 0.0
    %400 = vmatprep.subr.mxu0 0.0
    %401 = vmatpush1.msra.mxu0 0.0
    %402 = vmatprep.subr.mxu0 0.0
    %403 = vmatpush1.msra.mxu0 0.0
    %404 = vmatprep.subr.mxu0 0.0
    %405 = vmatpush1.msra.mxu0 0.0
    %406 = vmatprep.subr.mxu0 0.0
    %407 = vmatpush1.msra.mxu0 %v138
    %408 = vmatprep.subr.mxu0 0.0
    %409 = vmatpush1.msra.mxu0 %v137
    %410 = vmatprep.subr.mxu0 0.0
    %411 = vmatpush1.msra.mxu0 %v136
    %412 = vmatprep.subr.mxu0 0.0
    %413 = vmatpush1.msra.mxu0 %v135
    %414 = vmatprep.subr.mxu0 0.0
    %415 = vmatpush2.msra.mxu0 0.0
    %416 = vmatprep.subr.mxu0 0.0
    %417 = vmatpush2.msra.mxu0 0.0
    %418 = vmatprep.subr.mxu0 0.0
    %419 = vmatpush2.msra.mxu0 0.0
    %420 = vmatprep.subr.mxu0 0.0
    %421 = vmatpush2.msra.mxu0 0.0
    %422 = vmatprep.subr.mxu0 0.0
    %423 = vmatpush2.msra.mxu0 0.0
    %424 = vmatprep.subr.mxu0 0.0
    %425 = vmatpush2.msra.mxu0 0.0
    %426 = vmatprep.subr.mxu0 0.0
    %427 = vmatpush2.msra.mxu0 0.0
    %428 = vmatprep.subr.mxu0 0.0
    %429 = vmatpush2.msra.mxu0 0.0
    %430 = vmatprep.subr.mxu0 0.0
    %431 = vmatpush2.msra.mxu0 0.0
    %432 = vmatprep.subr.mxu0 0.0
    %433 = vmatpush2.msra.mxu0 0.0
    %434 = vmatprep.subr.mxu0 0.0
    %435 = vmatpush2.msra.mxu0 0.0
    %436 = vmatprep.subr.mxu0 0.0
    %437 = vmatpush2.msra.mxu0 0.0
    %438 = vmatprep.subr.mxu0 0.0
    %439 = vmatpush2.msra.mxu0 0.0
    %440 = vmatprep.subr.mxu0 0.0
    %441 = vmatpush2.msra.mxu0 0.0
    %442 = vmatprep.subr.mxu0 0.0
    %443 = vmatpush2.msra.mxu0 0.0
    %444 = vmatprep.subr.mxu0 0.0
    %445 = vmatpush2.msra.mxu0 0.0
    %446 = vmatprep.mubr.f32.mxu0 0.0
    %447 = vmatmul.mubr.f32.gmra.mxu0 %v254
    %v448 = vpop.f32.mrf.mxu0
    %v449 = vadd.f32 %v132, %v448
    %v450 = vpop.f32.mrf.mxu0
    %451 = vdwg.mxu0
    %v452 = vxor.u32 %v449, 2147483648
    %v453 = vmul.f32 %v452, 1.442695
    %v454 = vpow.pop %v453
    %v455 = vadd.f32 %v454, 1.0
    %v456 = vrcp.pop %v455
    %v457 = vmul.f32 1.0, %v456
    %v458 = vtanh.pop %v449
    %v459 = vmul.f32 %v457, %v244
    %461 = vrot.lane.b32.xlu0 %v458, 64
    %v462 = vpop.permute.xlu0 %461
    %v464 = vmul.f32 %v457, %v462
    %466 = vrot.lane.b32.xlu0 %v464, 32
    %v467 = vpop.permute.xlu0 %466
    %v469 = vadd.f32 %v459, %v467
    %v470 = vtanh.pop %v469
    %472 = vrot.lane.b32.xlu0 %v470, 64
    %v473 = vpop.permute.xlu0 %472
    %v475 = vmul.f32 %v457, %v473
    %477 = vrot.lane.b32.xlu0 %v475, 32
    %v478 = vpop.permute.xlu0 %477
    %v479 = vsel %vm153, %v478, 0
    %481 = vmatprep.subr.mxu0 0.0
    %482 = vmatpush1.msra.mxu0 0.0
    %483 = vmatprep.subr.mxu0 0.0
    %484 = vmatpush1.msra.mxu0 0.0
    %485 = vmatprep.subr.mxu0 0.0
    %486 = vmatpush1.msra.mxu0 0.0
    %487 = vmatprep.subr.mxu0 0.0
    %488 = vmatpush1.msra.mxu0 0.0
    %489 = vmatprep.subr.mxu0 0.0
    %490 = vmatpush1.msra.mxu0 0.0
    %491 = vmatprep.subr.mxu0 0.0
    %492 = vmatpush1.msra.mxu0 0.0
    %493 = vmatprep.subr.mxu0 0.0
    %494 = vmatpush1.msra.mxu0 0.0
    %495 = vmatprep.subr.mxu0 0.0
    %496 = vmatpush1.msra.mxu0 0.0
    %497 = vmatprep.subr.mxu0 0.0
    %498 = vmatpush1.msra.mxu0 0.0
    %499 = vmatprep.subr.mxu0 0.0
    %500 = vmatpush1.msra.mxu0 0.0
    %501 = vmatprep.subr.mxu0 0.0
    %502 = vmatpush1.msra.mxu0 0.0
    %503 = vmatprep.subr.mxu0 0.0
    %504 = vmatpush1.msra.mxu0 0.0
    %505 = vmatprep.subr.mxu0 0.0
    %506 = vmatpush1.msra.mxu0 %v142
    %507 = vmatprep.subr.mxu0 0.0
    %508 = vmatpush1.msra.mxu0 %v141
    %509 = vmatprep.subr.mxu0 0.0
    %510 = vmatpush1.msra.mxu0 %v140
    %511 = vmatprep.subr.mxu0 0.0
    %512 = vmatpush1.msra.mxu0 %v139
    %513 = vmatprep.subr.mxu0 0.0
    %514 = vmatpush2.msra.mxu0 0.0
    %515 = vmatprep.subr.mxu0 0.0
    %516 = vmatpush2.msra.mxu0 0.0
    %517 = vmatprep.subr.mxu0 0.0
    %518 = vmatpush2.msra.mxu0 0.0
    %519 = vmatprep.subr.mxu0 0.0
    %520 = vmatpush2.msra.mxu0 0.0
    %521 = vmatprep.subr.mxu0 0.0
    %522 = vmatpush2.msra.mxu0 0.0
    %523 = vmatprep.subr.mxu0 0.0
    %524 = vmatpush2.msra.mxu0 0.0
    %525 = vmatprep.subr.mxu0 0.0
    %526 = vmatpush2.msra.mxu0 0.0
    %527 = vmatprep.subr.mxu0 0.0
    %528 = vmatpush2.msra.mxu0 0.0
    %529 = vmatprep.subr.mxu0 0.0
    %530 = vmatpush2.msra.mxu0 0.0
    %531 = vmatprep.subr.mxu0 0.0
    %532 = vmatpush2.msra.mxu0 0.0
    %533 = vmatprep.subr.mxu0 0.0
    %534 = vmatpush2.msra.mxu0 0.0
    %535 = vmatprep.subr.mxu0 0.0
    %536 = vmatpush2.msra.mxu0 0.0
    %537 = vmatprep.subr.mxu0 0.0
    %538 = vmatpush2.msra.mxu0 0.0
    %539 = vmatprep.subr.mxu0 0.0
    %540 = vmatpush2.msra.mxu0 0.0
    %541 = vmatprep.subr.mxu0 0.0
    %542 = vmatpush2.msra.mxu0 0.0
    %543 = vmatprep.subr.mxu0 0.0
    %544 = vmatpush2.msra.mxu0 0.0
    %545 = vmatprep.mubr.f32.mxu0 0.0
    %546 = vmatmul.mubr.f32.gmra.mxu0 %v479
    %v547 = vpop.f32.mrf.mxu0
    %v548 = vadd.f32 %v149, %v547
    %v549 = vpop.f32.mrf.mxu0
    %550 = vdwg.mxu0
    %552 = vset.pattern.permute.xlu0 3
    %553 = vperm.xlu0 %552, %v357
    %v554 = vpop.permute.xlu0 %553
    %v556 = vmul.f32 %v554, %v330
    %v557 = vadd.f32 %v548, %v556
    %v558 = vxor.u32 %v557, 2147483648
    %v559 = vmul.f32 %v558, 1.442695
    %v560 = vpow.pop %v559
    %v561 = vadd.f32 %v560, 1.0
    %v562 = vrcp.pop %v561
    %v563 = vmul.f32 1.0, %v562
    %v564 = vtanh.pop %v557
    %v565 = vmul.f32 %v563, %v351
    %567 = vrot.lane.b32.xlu0 %v564, 126
    %v568 = vpop.permute.xlu0 %567
    %v570 = vmul.f32 %v563, %v568
    %572 = vrot.lane.b32.xlu0 %v570, 1
    %v573 = vpop.permute.xlu0 %572
    %v575 = vadd.f32 %v565, %v573
    %v576 = vtanh.pop %v575
    %578 = vrot.lane.b32.xlu0 %v576, 2
    %v579 = vpop.permute.xlu0 %578
    %v581 = vmul.f32 %v563, %v579
    %v582 = vmul.f32 %v581, %v364
    %v583 = vadd.f32 %v582, %v373
    %585 = vrot.lane.b32.xlu0 %v583, 126
    %v586 = vpop.permute.xlu0 %585
    %vm588 = vcmask 9224
    %589 = vst.msk [vmem:[#allocation7] sm:$0x3] %vm588, %v586
    %590 = vmatprep.subr.mxu0 0.0
    %591 = vmatpush1.msra.mxu0 0.0
    %592 = vmatprep.subr.mxu0 0.0
    %593 = vmatpush1.msra.mxu0 0.0
    %594 = vmatprep.subr.mxu0 0.0
    %595 = vmatpush1.msra.mxu0 0.0
    %596 = vmatprep.subr.mxu0 0.0
    %597 = vmatpush1.msra.mxu0 0.0
    %598 = vmatprep.subr.mxu0 0.0
    %599 = vmatpush1.msra.mxu0 0.0
    %600 = vmatprep.subr.mxu0 0.0
    %601 = vmatpush1.msra.mxu0 0.0
    %602 = vmatprep.subr.mxu0 0.0
    %603 = vmatpush1.msra.mxu0 0.0
    %604 = vmatprep.subr.mxu0 0.0
    %605 = vmatpush1.msra.mxu0 0.0
    %606 = vmatprep.subr.mxu0 0.0
    %607 = vmatpush1.msra.mxu0 0.0
    %608 = vmatprep.subr.mxu0 0.0
    %609 = vmatpush1.msra.mxu0 0.0
    %610 = vmatprep.subr.mxu0 0.0
    %611 = vmatpush1.msra.mxu0 0.0
    %612 = vmatprep.subr.mxu0 0.0
    %613 = vmatpush1.msra.mxu0 0.0
    %614 = vmatprep.subr.mxu0 0.0
    %615 = vmatpush1.msra.mxu0 %v138
    %616 = vmatprep.subr.mxu0 0.0
    %617 = vmatpush1.msra.mxu0 %v137
    %618 = vmatprep.subr.mxu0 0.0
    %619 = vmatpush1.msra.mxu0 %v136
    %620 = vmatprep.subr.mxu0 0.0
    %621 = vmatpush1.msra.mxu0 %v135
    %622 = vmatprep.subr.mxu0 0.0
    %623 = vmatpush2.msra.mxu0 0.0
    %624 = vmatprep.subr.mxu0 0.0
    %625 = vmatpush2.msra.mxu0 0.0
    %626 = vmatprep.subr.mxu0 0.0
    %627 = vmatpush2.msra.mxu0 0.0
    %628 = vmatprep.subr.mxu0 0.0
    %629 = vmatpush2.msra.mxu0 0.0
    %630 = vmatprep.subr.mxu0 0.0
    %631 = vmatpush2.msra.mxu0 0.0
    %632 = vmatprep.subr.mxu0 0.0
    %633 = vmatpush2.msra.mxu0 0.0
    %634 = vmatprep.subr.mxu0 0.0
    %635 = vmatpush2.msra.mxu0 0.0
    %636 = vmatprep.subr.mxu0 0.0
    %637 = vmatpush2.msra.mxu0 0.0
    %638 = vmatprep.subr.mxu0 0.0
    %639 = vmatpush2.msra.mxu0 0.0
    %640 = vmatprep.subr.mxu0 0.0
    %641 = vmatpush2.msra.mxu0 0.0
    %642 = vmatprep.subr.mxu0 0.0
    %643 = vmatpush2.msra.mxu0 0.0
    %644 = vmatprep.subr.mxu0 0.0
    %645 = vmatpush2.msra.mxu0 0.0
    %646 = vmatprep.subr.mxu0 0.0
    %647 = vmatpush2.msra.mxu0 0.0
    %648 = vmatprep.subr.mxu0 0.0
    %649 = vmatpush2.msra.mxu0 0.0
    %650 = vmatprep.subr.mxu0 0.0
    %651 = vmatpush2.msra.mxu0 0.0
    %652 = vmatprep.subr.mxu0 0.0
    %653 = vmatpush2.msra.mxu0 0.0
    %654 = vmatprep.mubr.f32.mxu0 0.0
    %655 = vmatmul.mubr.f32.gmra.mxu0 %v479
    %v656 = vpop.f32.mrf.mxu0
    %v657 = vadd.f32 %v132, %v656
    %v658 = vpop.f32.mrf.mxu0
    %659 = vdwg.mxu0
    %v660 = vxor.u32 %v657, 2147483648
    %v661 = vmul.f32 %v660, 1.442695
    %v662 = vpow.pop %v661
    %v663 = vadd.f32 %v662, 1.0
    %v664 = vrcp.pop %v663
    %v665 = vmul.f32 1.0, %v664
    %v666 = vtanh.pop %v657
    %v667 = vmul.f32 %v665, %v469
    %669 = vrot.lane.b32.xlu0 %v666, 64
    %v670 = vpop.permute.xlu0 %669
    %v672 = vmul.f32 %v665, %v670
    %674 = vrot.lane.b32.xlu0 %v672, 32
    %v675 = vpop.permute.xlu0 %674
    %v677 = vadd.f32 %v667, %v675
    %v678 = vtanh.pop %v677
    %680 = vrot.lane.b32.xlu0 %v678, 64
    %v681 = vpop.permute.xlu0 %680
    %v683 = vmul.f32 %v665, %v681
    %685 = vrot.lane.b32.xlu0 %v683, 32
    %v686 = vpop.permute.xlu0 %685
    %v687 = vsel %vm153, %v686, 0
    %689 = vmatprep.subr.mxu0 0.0
    %690 = vmatpush1.msra.mxu0 0.0
    %691 = vmatprep.subr.mxu0 0.0
    %692 = vmatpush1.msra.mxu0 0.0
    %693 = vmatprep.subr.mxu0 0.0
    %694 = vmatpush1.msra.mxu0 0.0
    %695 = vmatprep.subr.mxu0 0.0
    %696 = vmatpush1.msra.mxu0 0.0
    %697 = vmatprep.subr.mxu0 0.0
    %698 = vmatpush1.msra.mxu0 0.0
    %699 = vmatprep.subr.mxu0 0.0
    %700 = vmatpush1.msra.mxu0 0.0
    %701 = vmatprep.subr.mxu0 0.0
    %702 = vmatpush1.msra.mxu0 0.0
    %703 = vmatprep.subr.mxu0 0.0
    %704 = vmatpush1.msra.mxu0 0.0
    %705 = vmatprep.subr.mxu0 0.0
    %706 = vmatpush1.msra.mxu0 0.0
    %707 = vmatprep.subr.mxu0 0.0
    %708 = vmatpush1.msra.mxu0 0.0
    %709 = vmatprep.subr.mxu0 0.0
    %710 = vmatpush1.msra.mxu0 0.0
    %711 = vmatprep.subr.mxu0 0.0
    %712 = vmatpush1.msra.mxu0 0.0
    %713 = vmatprep.subr.mxu0 0.0
    %714 = vmatpush1.msra.mxu0 %v142
    %715 = vmatprep.subr.mxu0 0.0
    %716 = vmatpush1.msra.mxu0 %v141
    %717 = vmatprep.subr.mxu0 0.0
    %718 = vmatpush1.msra.mxu0 %v140
    %719 = vmatprep.subr.mxu0 0.0
    %720 = vmatpush1.msra.mxu0 %v139
    %721 = vmatprep.subr.mxu0 0.0
    %722 = vmatpush2.msra.mxu0 0.0
    %723 = vmatprep.subr.mxu0 0.0
    %724 = vmatpush2.msra.mxu0 0.0
    %725 = vmatprep.subr.mxu0 0.0
    %726 = vmatpush2.msra.mxu0 0.0
    %727 = vmatprep.subr.mxu0 0.0
    %728 = vmatpush2.msra.mxu0 0.0
    %729 = vmatprep.subr.mxu0 0.0
    %730 = vmatpush2.msra.mxu0 0.0
    %731 = vmatprep.subr.mxu0 0.0
    %732 = vmatpush2.msra.mxu0 0.0
    %733 = vmatprep.subr.mxu0 0.0
    %734 = vmatpush2.msra.mxu0 0.0
    %735 = vmatprep.subr.mxu0 0.0
    %736 = vmatpush2.msra.mxu0 0.0
    %737 = vmatprep.subr.mxu0 0.0
    %738 = vmatpush2.msra.mxu0 0.0
    %739 = vmatprep.subr.mxu0 0.0
    %740 = vmatpush2.msra.mxu0 0.0
    %741 = vmatprep.subr.mxu0 0.0
    %742 = vmatpush2.msra.mxu0 0.0
    %743 = vmatprep.subr.mxu0 0.0
    %744 = vmatpush2.msra.mxu0 0.0
    %745 = vmatprep.subr.mxu0 0.0
    %746 = vmatpush2.msra.mxu0 0.0
    %747 = vmatprep.subr.mxu0 0.0
    %748 = vmatpush2.msra.mxu0 0.0
    %749 = vmatprep.subr.mxu0 0.0
    %750 = vmatpush2.msra.mxu0 0.0
    %751 = vmatprep.subr.mxu0 0.0
    %752 = vmatpush2.msra.mxu0 0.0
    %753 = vmatprep.mubr.f32.mxu0 0.0
    %754 = vmatmul.mubr.f32.gmra.mxu0 %v687
    %v755 = vpop.f32.mrf.mxu0
    %v756 = vadd.f32 %v149, %v755
    %v757 = vpop.f32.mrf.mxu0
    %758 = vdwg.mxu0
    %760 = vset.pattern.permute.xlu0 3
    %761 = vperm.xlu0 %760, %v581
    %v762 = vpop.permute.xlu0 %761
    %v764 = vmul.f32 %v762, %v330
    %v765 = vadd.f32 %v756, %v764
    %v766 = vxor.u32 %v765, 2147483648
    %v767 = vmul.f32 %v766, 1.442695
    %v768 = vpow.pop %v767
    %v769 = vadd.f32 %v768, 1.0
    %v770 = vrcp.pop %v769
    %v771 = vmul.f32 1.0, %v770
    %v772 = vtanh.pop %v765
    %v773 = vmul.f32 %v771, %v575
    %775 = vrot.lane.b32.xlu0 %v772, 126
    %v776 = vpop.permute.xlu0 %775
    %v778 = vmul.f32 %v771, %v776
    %780 = vrot.lane.b32.xlu0 %v778, 1
    %v781 = vpop.permute.xlu0 %780
    %v783 = vadd.f32 %v773, %v781
    %v784 = vtanh.pop %v783
    %786 = vrot.lane.b32.xlu0 %v784, 2
    %v787 = vpop.permute.xlu0 %786
    %v789 = vmul.f32 %v771, %v787
    %v790 = vmul.f32 %v789, %v364
    %v791 = vadd.f32 %v790, %v373
    %793 = vrot.lane.b32.xlu0 %v791, 127
    %v794 = vpop.permute.xlu0 %793
    %vm796 = vcmask 17424
    %797 = vst.msk [vmem:[#allocation7] sm:$0x3] %vm796, %v794
    %798 = vmatprep.subr.mxu0 0.0
    %799 = vmatpush1.msra.mxu0 0.0
    %800 = vmatprep.subr.mxu0 0.0
    %801 = vmatpush1.msra.mxu0 0.0
    %802 = vmatprep.subr.mxu0 0.0
    %803 = vmatpush1.msra.mxu0 0.0
    %804 = vmatprep.subr.mxu0 0.0
    %805 = vmatpush1.msra.mxu0 0.0
    %806 = vmatprep.subr.mxu0 0.0
    %807 = vmatpush1.msra.mxu0 0.0
    %808 = vmatprep.subr.mxu0 0.0
    %809 = vmatpush1.msra.mxu0 0.0
    %810 = vmatprep.subr.mxu0 0.0
    %811 = vmatpush1.msra.mxu0 0.0
    %812 = vmatprep.subr.mxu0 0.0
    %813 = vmatpush1.msra.mxu0 0.0
    %814 = vmatprep.subr.mxu0 0.0
    %815 = vmatpush1.msra.mxu0 0.0
    %816 = vmatprep.subr.mxu0 0.0
    %817 = vmatpush1.msra.mxu0 0.0
    %818 = vmatprep.subr.mxu0 0.0
    %819 = vmatpush1.msra.mxu0 0.0
    %820 = vmatprep.subr.mxu0 0.0
    %821 = vmatpush1.msra.mxu0 0.0
    %822 = vmatprep.subr.mxu0 0.0
    %823 = vmatpush1.msra.mxu0 %v138
    %824 = vmatprep.subr.mxu0 0.0
    %825 = vmatpush1.msra.mxu0 %v137
    %826 = vmatprep.subr.mxu0 0.0
    %827 = vmatpush1.msra.mxu0 %v136
    %828 = vmatprep.subr.mxu0 0.0
    %829 = vmatpush1.msra.mxu0 %v135
    %830 = vmatprep.subr.mxu0 0.0
    %831 = vmatpush2.msra.mxu0 0.0
    %832 = vmatprep.subr.mxu0 0.0
    %833 = vmatpush2.msra.mxu0 0.0
    %834 = vmatprep.subr.mxu0 0.0
    %835 = vmatpush2.msra.mxu0 0.0
    %836 = vmatprep.subr.mxu0 0.0
    %837 = vmatpush2.msra.mxu0 0.0
    %838 = vmatprep.subr.mxu0 0.0
    %839 = vmatpush2.msra.mxu0 0.0
    %840 = vmatprep.subr.mxu0 0.0
    %841 = vmatpush2.msra.mxu0 0.0
    %842 = vmatprep.subr.mxu0 0.0
    %843 = vmatpush2.msra.mxu0 0.0
    %844 = vmatprep.subr.mxu0 0.0
    %845 = vmatpush2.msra.mxu0 0.0
    %846 = vmatprep.subr.mxu0 0.0
    %847 = vmatpush2.msra.mxu0 0.0
    %848 = vmatprep.subr.mxu0 0.0
    %849 = vmatpush2.msra.mxu0 0.0
    %850 = vmatprep.subr.mxu0 0.0
    %851 = vmatpush2.msra.mxu0 0.0
    %852 = vmatprep.subr.mxu0 0.0
    %853 = vmatpush2.msra.mxu0 0.0
    %854 = vmatprep.subr.mxu0 0.0
    %855 = vmatpush2.msra.mxu0 0.0
    %856 = vmatprep.subr.mxu0 0.0
    %857 = vmatpush2.msra.mxu0 0.0
    %858 = vmatprep.subr.mxu0 0.0
    %859 = vmatpush2.msra.mxu0 0.0
    %860 = vmatprep.subr.mxu0 0.0
    %861 = vmatpush2.msra.mxu0 0.0
    %862 = vmatprep.mubr.f32.mxu0 0.0
    %863 = vmatmul.mubr.f32.gmra.mxu0 %v687
    %v864 = vpop.f32.mrf.mxu0
    %v865 = vadd.f32 %v132, %v864
    %v866 = vpop.f32.mrf.mxu0
    %867 = vdwg.mxu0
    %v868 = vxor.u32 %v865, 2147483648
    %v869 = vmul.f32 %v868, 1.442695
    %v870 = vpow.pop %v869
    %v871 = vadd.f32 %v870, 1.0
    %v872 = vrcp.pop %v871
    %v873 = vmul.f32 1.0, %v872
    %v874 = vtanh.pop %v865
    %v875 = vmul.f32 %v873, %v677
    %877 = vrot.lane.b32.xlu0 %v874, 64
    %v878 = vpop.permute.xlu0 %877
    %v880 = vmul.f32 %v873, %v878
    %882 = vrot.lane.b32.xlu0 %v880, 32
    %v883 = vpop.permute.xlu0 %882
    %v885 = vadd.f32 %v875, %v883
    %v886 = vtanh.pop %v885
    %888 = vrot.lane.b32.xlu0 %v886, 64
    %v889 = vpop.permute.xlu0 %888
    %v891 = vmul.f32 %v873, %v889
    %893 = vrot.lane.b32.xlu0 %v891, 32
    %v894 = vpop.permute.xlu0 %893
    %v895 = vsel %vm153, %v894, 0
    %897 = vmatprep.subr.mxu0 0.0
    %898 = vmatpush1.msra.mxu0 0.0
    %899 = vmatprep.subr.mxu0 0.0
    %900 = vmatpush1.msra.mxu0 0.0
    %901 = vmatprep.subr.mxu0 0.0
    %902 = vmatpush1.msra.mxu0 0.0
    %903 = vmatprep.subr.mxu0 0.0
    %904 = vmatpush1.msra.mxu0 0.0
    %905 = vmatprep.subr.mxu0 0.0
    %906 = vmatpush1.msra.mxu0 0.0
    %907 = vmatprep.subr.mxu0 0.0
    %908 = vmatpush1.msra.mxu0 0.0
    %909 = vmatprep.subr.mxu0 0.0
    %910 = vmatpush1.msra.mxu0 0.0
    %911 = vmatprep.subr.mxu0 0.0
    %912 = vmatpush1.msra.mxu0 0.0
    %913 = vmatprep.subr.mxu0 0.0
    %914 = vmatpush1.msra.mxu0 0.0
    %915 = vmatprep.subr.mxu0 0.0
    %916 = vmatpush1.msra.mxu0 0.0
    %917 = vmatprep.subr.mxu0 0.0
    %918 = vmatpush1.msra.mxu0 0.0
    %919 = vmatprep.subr.mxu0 0.0
    %920 = vmatpush1.msra.mxu0 0.0
    %921 = vmatprep.subr.mxu0 0.0
    %922 = vmatpush1.msra.mxu0 %v142
    %923 = vmatprep.subr.mxu0 0.0
    %924 = vmatpush1.msra.mxu0 %v141
    %925 = vmatprep.subr.mxu0 0.0
    %926 = vmatpush1.msra.mxu0 %v140
    %927 = vmatprep.subr.mxu0 0.0
    %928 = vmatpush1.msra.mxu0 %v139
    %929 = vmatprep.subr.mxu0 0.0
    %930 = vmatpush2.msra.mxu0 0.0
    %931 = vmatprep.subr.mxu0 0.0
    %932 = vmatpush2.msra.mxu0 0.0
    %933 = vmatprep.subr.mxu0 0.0
    %934 = vmatpush2.msra.mxu0 0.0
    %935 = vmatprep.subr.mxu0 0.0
    %936 = vmatpush2.msra.mxu0 0.0
    %937 = vmatprep.subr.mxu0 0.0
    %938 = vmatpush2.msra.mxu0 0.0
    %939 = vmatprep.subr.mxu0 0.0
    %940 = vmatpush2.msra.mxu0 0.0
    %941 = vmatprep.subr.mxu0 0.0
    %942 = vmatpush2.msra.mxu0 0.0
    %943 = vmatprep.subr.mxu0 0.0
    %944 = vmatpush2.msra.mxu0 0.0
    %945 = vmatprep.subr.mxu0 0.0
    %946 = vmatpush2.msra.mxu0 0.0
    %947 = vmatprep.subr.mxu0 0.0
    %948 = vmatpush2.msra.mxu0 0.0
    %949 = vmatprep.subr.mxu0 0.0
    %950 = vmatpush2.msra.mxu0 0.0
    %951 = vmatprep.subr.mxu0 0.0
    %952 = vmatpush2.msra.mxu0 0.0
    %953 = vmatprep.subr.mxu0 0.0
    %954 = vmatpush2.msra.mxu0 0.0
    %955 = vmatprep.subr.mxu0 0.0
    %956 = vmatpush2.msra.mxu0 0.0
    %957 = vmatprep.subr.mxu0 0.0
    %958 = vmatpush2.msra.mxu0 0.0
    %959 = vmatprep.subr.mxu0 0.0
    %960 = vmatpush2.msra.mxu0 0.0
    %961 = vmatprep.mubr.f32.mxu0 0.0
    %962 = vmatmul.mubr.f32.gmra.mxu0 %v895
    %v963 = vpop.f32.mrf.mxu0
    %v964 = vadd.f32 %v149, %v963
    %v965 = vpop.f32.mrf.mxu0
    %966 = vdwg.mxu0
    %968 = vset.pattern.permute.xlu0 3
    %969 = vperm.xlu0 %968, %v789
    %v970 = vpop.permute.xlu0 %969
    %v972 = vmul.f32 %v970, %v330
    %v973 = vadd.f32 %v964, %v972
    %v974 = vxor.u32 %v973, 2147483648
    %v975 = vmul.f32 %v974, 1.442695
    %v976 = vpow.pop %v975
    %v977 = vadd.f32 %v976, 1.0
    %v978 = vrcp.pop %v977
    %v979 = vmul.f32 1.0, %v978
    %v980 = vtanh.pop %v973
    %v981 = vmul.f32 %v979, %v783
    %983 = vrot.lane.b32.xlu0 %v980, 126
    %v984 = vpop.permute.xlu0 %983
    %v986 = vmul.f32 %v979, %v984
    %988 = vrot.lane.b32.xlu0 %v986, 1
    %v989 = vpop.permute.xlu0 %988
    %v991 = vadd.f32 %v981, %v989
    %v992 = vtanh.pop %v991
    %994 = vrot.lane.b32.xlu0 %v992, 2
    %v995 = vpop.permute.xlu0 %994
    %v997 = vmul.f32 %v979, %v995
    %v998 = vmul.f32 %v997, %v364
    %v999 = vadd.f32 %v998, %v373
    %vm1000 = vcmask 25624
    %1001 = vst.msk [vmem:[#allocation7] sm:$0x3] %vm1000, %v999
    %1002 = vmatprep.subr.mxu0 0.0
    %1003 = vmatpush1.msra.mxu0 0.0
    %1004 = vmatprep.subr.mxu0 0.0
    %1005 = vmatpush1.msra.mxu0 0.0
    %1006 = vmatprep.subr.mxu0 0.0
    %1007 = vmatpush1.msra.mxu0 0.0
    %1008 = vmatprep.subr.mxu0 0.0
    %1009 = vmatpush1.msra.mxu0 0.0
    %1010 = vmatprep.subr.mxu0 0.0
    %1011 = vmatpush1.msra.mxu0 0.0
    %1012 = vmatprep.subr.mxu0 0.0
    %1013 = vmatpush1.msra.mxu0 0.0
    %1014 = vmatprep.subr.mxu0 0.0
    %1015 = vmatpush1.msra.mxu0 0.0
    %1016 = vmatprep.subr.mxu0 0.0
    %1017 = vmatpush1.msra.mxu0 0.0
    %1018 = vmatprep.subr.mxu0 0.0
    %1019 = vmatpush1.msra.mxu0 0.0
    %1020 = vmatprep.subr.mxu0 0.0
    %1021 = vmatpush1.msra.mxu0 0.0
    %1022 = vmatprep.subr.mxu0 0.0
    %1023 = vmatpush1.msra.mxu0 0.0
    %1024 = vmatprep.subr.mxu0 0.0
    %1025 = vmatpush1.msra.mxu0 0.0
    %1026 = vmatprep.subr.mxu0 0.0
    %1027 = vmatpush1.msra.mxu0 %v138
    %1028 = vmatprep.subr.mxu0 0.0
    %1029 = vmatpush1.msra.mxu0 %v137
    %1030 = vmatprep.subr.mxu0 0.0
    %1031 = vmatpush1.msra.mxu0 %v136
    %1032 = vmatprep.subr.mxu0 0.0
    %1033 = vmatpush1.msra.mxu0 %v135
    %1034 = vmatprep.subr.mxu0 0.0
    %1035 = vmatpush2.msra.mxu0 0.0
    %1036 = vmatprep.subr.mxu0 0.0
    %1037 = vmatpush2.msra.mxu0 0.0
    %1038 = vmatprep.subr.mxu0 0.0
    %1039 = vmatpush2.msra.mxu0 0.0
    %1040 = vmatprep.subr.mxu0 0.0
    %1041 = vmatpush2.msra.mxu0 0.0
    %1042 = vmatprep.subr.mxu0 0.0
    %1043 = vmatpush2.msra.mxu0 0.0
    %1044 = vmatprep.subr.mxu0 0.0
    %1045 = vmatpush2.msra.mxu0 0.0
    %1046 = vmatprep.subr.mxu0 0.0
    %1047 = vmatpush2.msra.mxu0 0.0
    %1048 = vmatprep.subr.mxu0 0.0
    %1049 = vmatpush2.msra.mxu0 0.0
    %1050 = vmatprep.subr.mxu0 0.0
    %1051 = vmatpush2.msra.mxu0 0.0
    %1052 = vmatprep.subr.mxu0 0.0
    %1053 = vmatpush2.msra.mxu0 0.0
    %1054 = vmatprep.subr.mxu0 0.0
    %1055 = vmatpush2.msra.mxu0 0.0
    %1056 = vmatprep.subr.mxu0 0.0
    %1057 = vmatpush2.msra.mxu0 0.0
    %1058 = vmatprep.subr.mxu0 0.0
    %1059 = vmatpush2.msra.mxu0 0.0
    %1060 = vmatprep.subr.mxu0 0.0
    %1061 = vmatpush2.msra.mxu0 0.0
    %1062 = vmatprep.subr.mxu0 0.0
    %1063 = vmatpush2.msra.mxu0 0.0
    %1064 = vmatprep.subr.mxu0 0.0
    %1065 = vmatpush2.msra.mxu0 0.0
    %1066 = vmatprep.mubr.f32.mxu0 0.0
    %1067 = vmatmul.mubr.f32.gmra.mxu0 %v895
    %v1068 = vpop.f32.mrf.mxu0
    %v1069 = vadd.f32 %v132, %v1068
    %v1070 = vpop.f32.mrf.mxu0
    %1071 = vdwg.mxu0
    %v1072 = vxor.u32 %v1069, 2147483648
    %v1073 = vmul.f32 %v1072, 1.442695
    %v1074 = vpow.pop %v1073
    %v1075 = vadd.f32 %v1074, 1.0
    %v1076 = vrcp.pop %v1075
    %v1077 = vmul.f32 1.0, %v1076
    %v1078 = vtanh.pop %v1069
    %v1079 = vmul.f32 %v1077, %v885
    %1081 = vrot.lane.b32.xlu0 %v1078, 64
    %v1082 = vpop.permute.xlu0 %1081
    %v1084 = vmul.f32 %v1077, %v1082
    %1086 = vrot.lane.b32.xlu0 %v1084, 32
    %v1087 = vpop.permute.xlu0 %1086
    %v1089 = vadd.f32 %v1079, %v1087
    %v1090 = vtanh.pop %v1089
    %1092 = vrot.lane.b32.xlu0 %v1090, 64
    %v1093 = vpop.permute.xlu0 %1092
    %v1095 = vmul.f32 %v1077, %v1093
    %1097 = vrot.lane.b32.xlu0 %v1095, 32
    %v1098 = vpop.permute.xlu0 %1097
    %v1099 = vsel %vm153, %v1098, 0
    %1101 = vmatprep.subr.mxu0 0.0
    %1102 = vmatpush1.msra.mxu0 0.0
    %1103 = vmatprep.subr.mxu0 0.0
    %1104 = vmatpush1.msra.mxu0 0.0
    %1105 = vmatprep.subr.mxu0 0.0
    %1106 = vmatpush1.msra.mxu0 0.0
    %1107 = vmatprep.subr.mxu0 0.0
    %1108 = vmatpush1.msra.mxu0 0.0
    %1109 = vmatprep.subr.mxu0 0.0
    %1110 = vmatpush1.msra.mxu0 0.0
    %1111 = vmatprep.subr.mxu0 0.0
    %1112 = vmatpush1.msra.mxu0 0.0
    %1113 = vmatprep.subr.mxu0 0.0
    %1114 = vmatpush1.msra.mxu0 0.0
    %1115 = vmatprep.subr.mxu0 0.0
    %1116 = vmatpush1.msra.mxu0 0.0
    %1117 = vmatprep.subr.mxu0 0.0
    %1118 = vmatpush1.msra.mxu0 0.0
    %1119 = vmatprep.subr.mxu0 0.0
    %1120 = vmatpush1.msra.mxu0 0.0
    %1121 = vmatprep.subr.mxu0 0.0
    %1122 = vmatpush1.msra.mxu0 0.0
    %1123 = vmatprep.subr.mxu0 0.0
    %1124 = vmatpush1.msra.mxu0 0.0
    %1125 = vmatprep.subr.mxu0 0.0
    %1126 = vmatpush1.msra.mxu0 %v142
    %1127 = vmatprep.subr.mxu0 0.0
    %1128 = vmatpush1.msra.mxu0 %v141
    %1129 = vmatprep.subr.mxu0 0.0
    %1130 = vmatpush1.msra.mxu0 %v140
    %1131 = vmatprep.subr.mxu0 0.0
    %1132 = vmatpush1.msra.mxu0 %v139
    %1133 = vmatprep.subr.mxu0 0.0
    %1134 = vmatpush2.msra.mxu0 0.0
    %1135 = vmatprep.subr.mxu0 0.0
    %1136 = vmatpush2.msra.mxu0 0.0
    %1137 = vmatprep.subr.mxu0 0.0
    %1138 = vmatpush2.msra.mxu0 0.0
    %1139 = vmatprep.subr.mxu0 0.0
    %1140 = vmatpush2.msra.mxu0 0.0
    %1141 = vmatprep.subr.mxu0 0.0
    %1142 = vmatpush2.msra.mxu0 0.0
    %1143 = vmatprep.subr.mxu0 0.0
    %1144 = vmatpush2.msra.mxu0 0.0
    %1145 = vmatprep.subr.mxu0 0.0
    %1146 = vmatpush2.msra.mxu0 0.0
    %1147 = vmatprep.subr.mxu0 0.0
    %1148 = vmatpush2.msra.mxu0 0.0
    %1149 = vmatprep.subr.mxu0 0.0
    %1150 = vmatpush2.msra.mxu0 0.0
    %1151 = vmatprep.subr.mxu0 0.0
    %1152 = vmatpush2.msra.mxu0 0.0
    %1153 = vmatprep.subr.mxu0 0.0
    %1154 = vmatpush2.msra.mxu0 0.0
    %1155 = vmatprep.subr.mxu0 0.0
    %1156 = vmatpush2.msra.mxu0 0.0
    %1157 = vmatprep.subr.mxu0 0.0
    %1158 = vmatpush2.msra.mxu0 0.0
    %1159 = vmatprep.subr.mxu0 0.0
    %1160 = vmatpush2.msra.mxu0 0.0
    %1161 = vmatprep.subr.mxu0 0.0
    %1162 = vmatpush2.msra.mxu0 0.0
    %1163 = vmatprep.subr.mxu0 0.0
    %1164 = vmatpush2.msra.mxu0 0.0
    %1165 = vmatprep.mubr.f32.mxu0 0.0
    %1166 = vmatmul.mubr.f32.gmra.mxu0 %v1099
    %v1167 = vpop.f32.mrf.mxu0
    %v1168 = vadd.f32 %v149, %v1167
    %v1169 = vpop.f32.mrf.mxu0
    %1170 = vdwg.mxu0
    %1172 = vset.pattern.permute.xlu0 3
    %1173 = vperm.xlu0 %1172, %v997
    %v1174 = vpop.permute.xlu0 %1173
    %v1176 = vmul.f32 %v1174, %v330
    %v1177 = vadd.f32 %v1168, %v1176
    %v1178 = vxor.u32 %v1177, 2147483648
    %v1179 = vmul.f32 %v1178, 1.442695
    %v1180 = vpow.pop %v1179
    %v1181 = vadd.f32 %v1180, 1.0
    %v1182 = vrcp.pop %v1181
    %v1183 = vmul.f32 1.0, %v1182
    %v1184 = vtanh.pop %v1177
    %v1185 = vmul.f32 %v1183, %v991
    %1187 = vrot.lane.b32.xlu0 %v1184, 126
    %v1188 = vpop.permute.xlu0 %1187
    %v1190 = vmul.f32 %v1183, %v1188
    %1192 = vrot.lane.b32.xlu0 %v1190, 1
    %v1193 = vpop.permute.xlu0 %1192
    %v1195 = vadd.f32 %v1185, %v1193
    %v1196 = vtanh.pop %v1195
    %1198 = vrot.lane.b32.xlu0 %v1196, 2
    %v1199 = vpop.permute.xlu0 %1198
    %v1201 = vmul.f32 %v1183, %v1199
    %v1202 = vmul.f32 %v1201, %v364
    %v1203 = vadd.f32 %v1202, %v373
    %1205 = vrot.lane.b32.xlu0 %v1203, 1
    %v1206 = vpop.permute.xlu0 %1205
    %vm1208 = vcmask 33824
    %1209 = vst.msk [vmem:[#allocation7] sm:$0x3] %vm1208, %v1206
    %1210 = vmatprep.subr.mxu0 0.0
    %1211 = vmatpush1.msra.mxu0 0.0
    %1212 = vmatprep.subr.mxu0 0.0
    %1213 = vmatpush1.msra.mxu0 0.0
    %1214 = vmatprep.subr.mxu0 0.0
    %1215 = vmatpush1.msra.mxu0 0.0
    %1216 = vmatprep.subr.mxu0 0.0
    %1217 = vmatpush1.msra.mxu0 0.0
    %1218 = vmatprep.subr.mxu0 0.0
    %1219 = vmatpush1.msra.mxu0 0.0
    %1220 = vmatprep.subr.mxu0 0.0
    %1221 = vmatpush1.msra.mxu0 0.0
    %1222 = vmatprep.subr.mxu0 0.0
    %1223 = vmatpush1.msra.mxu0 0.0
    %1224 = vmatprep.subr.mxu0 0.0
    %1225 = vmatpush1.msra.mxu0 0.0
    %1226 = vmatprep.subr.mxu0 0.0
    %1227 = vmatpush1.msra.mxu0 0.0
    %1228 = vmatprep.subr.mxu0 0.0
    %1229 = vmatpush1.msra.mxu0 0.0
    %1230 = vmatprep.subr.mxu0 0.0
    %1231 = vmatpush1.msra.mxu0 0.0
    %1232 = vmatprep.subr.mxu0 0.0
    %1233 = vmatpush1.msra.mxu0 0.0
    %1234 = vmatprep.subr.mxu0 0.0
    %1235 = vmatpush1.msra.mxu0 %v138
    %1236 = vmatprep.subr.mxu0 0.0
    %1237 = vmatpush1.msra.mxu0 %v137
    %1238 = vmatprep.subr.mxu0 0.0
    %1239 = vmatpush1.msra.mxu0 %v136
    %1240 = vmatprep.subr.mxu0 0.0
    %1241 = vmatpush1.msra.mxu0 %v135
    %1242 = vmatprep.subr.mxu0 0.0
    %1243 = vmatpush2.msra.mxu0 0.0
    %1244 = vmatprep.subr.mxu0 0.0
    %1245 = vmatpush2.msra.mxu0 0.0
    %1246 = vmatprep.subr.mxu0 0.0
    %1247 = vmatpush2.msra.mxu0 0.0
    %1248 = vmatprep.subr.mxu0 0.0
    %1249 = vmatpush2.msra.mxu0 0.0
    %1250 = vmatprep.subr.mxu0 0.0
    %1251 = vmatpush2.msra.mxu0 0.0
    %1252 = vmatprep.subr.mxu0 0.0
    %1253 = vmatpush2.msra.mxu0 0.0
    %1254 = vmatprep.subr.mxu0 0.0
    %1255 = vmatpush2.msra.mxu0 0.0
    %1256 = vmatprep.subr.mxu0 0.0
    %1257 = vmatpush2.msra.mxu0 0.0
    %1258 = vmatprep.subr.mxu0 0.0
    %1259 = vmatpush2.msra.mxu0 0.0
    %1260 = vmatprep.subr.mxu0 0.0
    %1261 = vmatpush2.msra.mxu0 0.0
    %1262 = vmatprep.subr.mxu0 0.0
    %1263 = vmatpush2.msra.mxu0 0.0
    %1264 = vmatprep.subr.mxu0 0.0
    %1265 = vmatpush2.msra.mxu0 0.0
    %1266 = vmatprep.subr.mxu0 0.0
    %1267 = vmatpush2.msra.mxu0 0.0
    %1268 = vmatprep.subr.mxu0 0.0
    %1269 = vmatpush2.msra.mxu0 0.0
    %1270 = vmatprep.subr.mxu0 0.0
    %1271 = vmatpush2.msra.mxu0 0.0
    %1272 = vmatprep.subr.mxu0 0.0
    %1273 = vmatpush2.msra.mxu0 0.0
    %1274 = vmatprep.mubr.f32.mxu0 0.0
    %1275 = vmatmul.mubr.f32.gmra.mxu0 %v1099
    %v1276 = vpop.f32.mrf.mxu0
    %v1277 = vadd.f32 %v132, %v1276
    %v1278 = vpop.f32.mrf.mxu0
    %1279 = vdwg.mxu0
    %v1280 = vxor.u32 %v1277, 2147483648
    %v1281 = vmul.f32 %v1280, 1.442695
    %v1282 = vpow.pop %v1281
    %v1283 = vadd.f32 %v1282, 1.0
    %v1284 = vrcp.pop %v1283
    %v1285 = vmul.f32 1.0, %v1284
    %v1286 = vtanh.pop %v1277
    %v1287 = vmul.f32 %v1285, %v1089
    %1289 = vrot.lane.b32.xlu0 %v1286, 64
    %v1290 = vpop.permute.xlu0 %1289
    %v1292 = vmul.f32 %v1285, %v1290
    %1294 = vrot.lane.b32.xlu0 %v1292, 32
    %v1295 = vpop.permute.xlu0 %1294
    %v1297 = vadd.f32 %v1287, %v1295
    %v1298 = vtanh.pop %v1297
    %1300 = vrot.lane.b32.xlu0 %v1298, 64
    %v1301 = vpop.permute.xlu0 %1300
    %v1303 = vmul.f32 %v1285, %v1301
    %1305 = vrot.lane.b32.xlu0 %v1303, 32
    %v1306 = vpop.permute.xlu0 %1305
    %v1307 = vsel %vm153, %v1306, 0
    %1309 = vmatprep.subr.mxu0 0.0
    %1310 = vmatpush1.msra.mxu0 0.0
    %1311 = vmatprep.subr.mxu0 0.0
    %1312 = vmatpush1.msra.mxu0 0.0
    %1313 = vmatprep.subr.mxu0 0.0
    %1314 = vmatpush1.msra.mxu0 0.0
    %1315 = vmatprep.subr.mxu0 0.0
    %1316 = vmatpush1.msra.mxu0 0.0
    %1317 = vmatprep.subr.mxu0 0.0
    %1318 = vmatpush1.msra.mxu0 0.0
    %1319 = vmatprep.subr.mxu0 0.0
    %1320 = vmatpush1.msra.mxu0 0.0
    %1321 = vmatprep.subr.mxu0 0.0
    %1322 = vmatpush1.msra.mxu0 0.0
    %1323 = vmatprep.subr.mxu0 0.0
    %1324 = vmatpush1.msra.mxu0 0.0
    %1325 = vmatprep.subr.mxu0 0.0
    %1326 = vmatpush1.msra.mxu0 0.0
    %1327 = vmatprep.subr.mxu0 0.0
    %1328 = vmatpush1.msra.mxu0 0.0
    %1329 = vmatprep.subr.mxu0 0.0
    %1330 = vmatpush1.msra.mxu0 0.0
    %1331 = vmatprep.subr.mxu0 0.0
    %1332 = vmatpush1.msra.mxu0 0.0
    %1333 = vmatprep.subr.mxu0 0.0
    %1334 = vmatpush1.msra.mxu0 %v142
    %1335 = vmatprep.subr.mxu0 0.0
    %1336 = vmatpush1.msra.mxu0 %v141
    %1337 = vmatprep.subr.mxu0 0.0
    %1338 = vmatpush1.msra.mxu0 %v140
    %1339 = vmatprep.subr.mxu0 0.0
    %1340 = vmatpush1.msra.mxu0 %v139
    %1341 = vmatprep.subr.mxu0 0.0
    %1342 = vmatpush2.msra.mxu0 0.0
    %1343 = vmatprep.subr.mxu0 0.0
    %1344 = vmatpush2.msra.mxu0 0.0
    %1345 = vmatprep.subr.mxu0 0.0
    %1346 = vmatpush2.msra.mxu0 0.0
    %1347 = vmatprep.subr.mxu0 0.0
    %1348 = vmatpush2.msra.mxu0 0.0
    %1349 = vmatprep.subr.mxu0 0.0
    %1350 = vmatpush2.msra.mxu0 0.0
    %1351 = vmatprep.subr.mxu0 0.0
    %1352 = vmatpush2.msra.mxu0 0.0
    %1353 = vmatprep.subr.mxu0 0.0
    %1354 = vmatpush2.msra.mxu0 0.0
    %1355 = vmatprep.subr.mxu0 0.0
    %1356 = vmatpush2.msra.mxu0 0.0
    %1357 = vmatprep.subr.mxu0 0.0
    %1358 = vmatpush2.msra.mxu0 0.0
    %1359 = vmatprep.subr.mxu0 0.0
    %1360 = vmatpush2.msra.mxu0 0.0
    %1361 = vmatprep.subr.mxu0 0.0
    %1362 = vmatpush2.msra.mxu0 0.0
    %1363 = vmatprep.subr.mxu0 0.0
    %1364 = vmatpush2.msra.mxu0 0.0
    %1365 = vmatprep.subr.mxu0 0.0
    %1366 = vmatpush2.msra.mxu0 0.0
    %1367 = vmatprep.subr.mxu0 0.0
    %1368 = vmatpush2.msra.mxu0 0.0
    %1369 = vmatprep.subr.mxu0 0.0
    %1370 = vmatpush2.msra.mxu0 0.0
    %1371 = vmatprep.subr.mxu0 0.0
    %1372 = vmatpush2.msra.mxu0 0.0
    %1373 = vmatprep.mubr.f32.mxu0 0.0
    %1374 = vmatmul.mubr.f32.gmra.mxu0 %v1307
    %v1375 = vpop.f32.mrf.mxu0
    %v1376 = vadd.f32 %v149, %v1375
    %v1377 = vpop.f32.mrf.mxu0
    %1378 = vdwg.mxu0
    %1380 = vset.pattern.permute.xlu0 3
    %1381 = vperm.xlu0 %1380, %v1201
    %v1382 = vpop.permute.xlu0 %1381
    %v1384 = vmul.f32 %v1382, %v330
    %v1385 = vadd.f32 %v1376, %v1384
    %v1386 = vxor.u32 %v1385, 2147483648
    %v1387 = vmul.f32 %v1386, 1.442695
    %v1388 = vpow.pop %v1387
    %v1389 = vadd.f32 %v1388, 1.0
    %v1390 = vrcp.pop %v1389
    %v1391 = vmul.f32 1.0, %v1390
    %v1392 = vtanh.pop %v1385
    %v1393 = vmul.f32 %v1391, %v1195
    %1395 = vrot.lane.b32.xlu0 %v1392, 126
    %v1396 = vpop.permute.xlu0 %1395
    %v1398 = vmul.f32 %v1391, %v1396
    %1400 = vrot.lane.b32.xlu0 %v1398, 1
    %v1401 = vpop.permute.xlu0 %1400
    %v1403 = vadd.f32 %v1393, %v1401
    %v1404 = vtanh.pop %v1403
    %1406 = vrot.lane.b32.xlu0 %v1404, 2
    %v1407 = vpop.permute.xlu0 %1406
    %v1409 = vmul.f32 %v1391, %v1407
    %v1410 = vmul.f32 %v1409, %v364
    %v1411 = vadd.f32 %v1410, %v373
    %1413 = vrot.lane.b32.xlu0 %v1411, 2
    %v1414 = vpop.permute.xlu0 %1413
    %vm1416 = vcmask 42024
    %1417 = vst.msk [vmem:[#allocation7] sm:$0x3] %vm1416, %v1414
    %1418 = vmatprep.subr.mxu0 0.0
    %1419 = vmatpush1.msra.mxu0 0.0
    %1420 = vmatprep.subr.mxu0 0.0
    %1421 = vmatpush1.msra.mxu0 0.0
    %1422 = vmatprep.subr.mxu0 0.0
    %1423 = vmatpush1.msra.mxu0 0.0
    %1424 = vmatprep.subr.mxu0 0.0
    %1425 = vmatpush1.msra.mxu0 0.0
    %1426 = vmatprep.subr.mxu0 0.0
    %1427 = vmatpush1.msra.mxu0 0.0
    %1428 = vmatprep.subr.mxu0 0.0
    %1429 = vmatpush1.msra.mxu0 0.0
    %1430 = vmatprep.subr.mxu0 0.0
    %1431 = vmatpush1.msra.mxu0 0.0
    %1432 = vmatprep.subr.mxu0 0.0
    %1433 = vmatpush1.msra.mxu0 0.0
    %1434 = vmatprep.subr.mxu0 0.0
    %1435 = vmatpush1.msra.mxu0 0.0
    %1436 = vmatprep.subr.mxu0 0.0
    %1437 = vmatpush1.msra.mxu0 0.0
    %1438 = vmatprep.subr.mxu0 0.0
    %1439 = vmatpush1.msra.mxu0 0.0
    %1440 = vmatprep.subr.mxu0 0.0
    %1441 = vmatpush1.msra.mxu0 0.0
    %1442 = vmatprep.subr.mxu0 0.0
    %1443 = vmatpush1.msra.mxu0 %v138
    %1444 = vmatprep.subr.mxu0 0.0
    %1445 = vmatpush1.msra.mxu0 %v137
    %1446 = vmatprep.subr.mxu0 0.0
    %1447 = vmatpush1.msra.mxu0 %v136
    %1448 = vmatprep.subr.mxu0 0.0
    %1449 = vmatpush1.msra.mxu0 %v135
    %1450 = vmatprep.subr.mxu0 0.0
    %1451 = vmatpush2.msra.mxu0 0.0
    %1452 = vmatprep.subr.mxu0 0.0
    %1453 = vmatpush2.msra.mxu0 0.0
    %1454 = vmatprep.subr.mxu0 0.0
    %1455 = vmatpush2.msra.mxu0 0.0
    %1456 = vmatprep.subr.mxu0 0.0
    %1457 = vmatpush2.msra.mxu0 0.0
    %1458 = vmatprep.subr.mxu0 0.0
    %1459 = vmatpush2.msra.mxu0 0.0
    %1460 = vmatprep.subr.mxu0 0.0
    %1461 = vmatpush2.msra.mxu0 0.0
    %1462 = vmatprep.subr.mxu0 0.0
    %1463 = vmatpush2.msra.mxu0 0.0
    %1464 = vmatprep.subr.mxu0 0.0
    %1465 = vmatpush2.msra.mxu0 0.0
    %1466 = vmatprep.subr.mxu0 0.0
    %1467 = vmatpush2.msra.mxu0 0.0
    %1468 = vmatprep.subr.mxu0 0.0
    %1469 = vmatpush2.msra.mxu0 0.0
    %1470 = vmatprep.subr.mxu0 0.0
    %1471 = vmatpush2.msra.mxu0 0.0
    %1472 = vmatprep.subr.mxu0 0.0
    %1473 = vmatpush2.msra.mxu0 0.0
    %1474 = vmatprep.subr.mxu0 0.0
    %1475 = vmatpush2.msra.mxu0 0.0
    %1476 = vmatprep.subr.mxu0 0.0
    %1477 = vmatpush2.msra.mxu0 0.0
    %1478 = vmatprep.subr.mxu0 0.0
    %1479 = vmatpush2.msra.mxu0 0.0
    %1480 = vmatprep.subr.mxu0 0.0
    %1481 = vmatpush2.msra.mxu0 0.0
    %1482 = vmatprep.mubr.f32.mxu0 0.0
    %1483 = vmatmul.mubr.f32.gmra.mxu0 %v1307
    %v1484 = vpop.f32.mrf.mxu0
    %v1485 = vadd.f32 %v132, %v1484
    %v1486 = vpop.f32.mrf.mxu0
    %1487 = vdwg.mxu0
    %v1488 = vxor.u32 %v1485, 2147483648
    %v1489 = vmul.f32 %v1488, 1.442695
    %v1490 = vpow.pop %v1489
    %v1491 = vadd.f32 %v1490, 1.0
    %v1492 = vrcp.pop %v1491
    %v1493 = vmul.f32 1.0, %v1492
    %v1494 = vtanh.pop %v1485
    %v1495 = vmul.f32 %v1493, %v1297
    %1497 = vrot.lane.b32.xlu0 %v1494, 64
    %v1498 = vpop.permute.xlu0 %1497
    %v1500 = vmul.f32 %v1493, %v1498
    %1502 = vrot.lane.b32.xlu0 %v1500, 32
    %v1503 = vpop.permute.xlu0 %1502
    %v1505 = vadd.f32 %v1495, %v1503
    %v1506 = vtanh.pop %v1505
    %1508 = vrot.lane.b32.xlu0 %v1506, 64
    %v1509 = vpop.permute.xlu0 %1508
    %v1511 = vmul.f32 %v1493, %v1509
    %1513 = vrot.lane.b32.xlu0 %v1511, 32
    %v1514 = vpop.permute.xlu0 %1513
    %v1515 = vsel %vm153, %v1514, 0
    %1517 = vmatprep.subr.mxu0 0.0
    %1518 = vmatpush1.msra.mxu0 0.0
    %1519 = vmatprep.subr.mxu0 0.0
    %1520 = vmatpush1.msra.mxu0 0.0
    %1521 = vmatprep.subr.mxu0 0.0
    %1522 = vmatpush1.msra.mxu0 0.0
    %1523 = vmatprep.subr.mxu0 0.0
    %1524 = vmatpush1.msra.mxu0 0.0
    %1525 = vmatprep.subr.mxu0 0.0
    %1526 = vmatpush1.msra.mxu0 0.0
    %1527 = vmatprep.subr.mxu0 0.0
    %1528 = vmatpush1.msra.mxu0 0.0
    %1529 = vmatprep.subr.mxu0 0.0
    %1530 = vmatpush1.msra.mxu0 0.0
    %1531 = vmatprep.subr.mxu0 0.0
    %1532 = vmatpush1.msra.mxu0 0.0
    %1533 = vmatprep.subr.mxu0 0.0
    %1534 = vmatpush1.msra.mxu0 0.0
    %1535 = vmatprep.subr.mxu0 0.0
    %1536 = vmatpush1.msra.mxu0 0.0
    %1537 = vmatprep.subr.mxu0 0.0
    %1538 = vmatpush1.msra.mxu0 0.0
    %1539 = vmatprep.subr.mxu0 0.0
    %1540 = vmatpush1.msra.mxu0 0.0
    %1541 = vmatprep.subr.mxu0 0.0
    %1542 = vmatpush1.msra.mxu0 %v142
    %1543 = vmatprep.subr.mxu0 0.0
    %1544 = vmatpush1.msra.mxu0 %v141
    %1545 = vmatprep.subr.mxu0 0.0
    %1546 = vmatpush1.msra.mxu0 %v140
    %1547 = vmatprep.subr.mxu0 0.0
    %1548 = vmatpush1.msra.mxu0 %v139
    %1549 = vmatprep.subr.mxu0 0.0
    %1550 = vmatpush2.msra.mxu0 0.0
    %1551 = vmatprep.subr.mxu0 0.0
    %1552 = vmatpush2.msra.mxu0 0.0
    %1553 = vmatprep.subr.mxu0 0.0
    %1554 = vmatpush2.msra.mxu0 0.0
    %1555 = vmatprep.subr.mxu0 0.0
    %1556 = vmatpush2.msra.mxu0 0.0
    %1557 = vmatprep.subr.mxu0 0.0
    %1558 = vmatpush2.msra.mxu0 0.0
    %1559 = vmatprep.subr.mxu0 0.0
    %1560 = vmatpush2.msra.mxu0 0.0
    %1561 = vmatprep.subr.mxu0 0.0
    %1562 = vmatpush2.msra.mxu0 0.0
    %1563 = vmatprep.subr.mxu0 0.0
    %1564 = vmatpush2.msra.mxu0 0.0
    %1565 = vmatprep.subr.mxu0 0.0
    %1566 = vmatpush2.msra.mxu0 0.0
    %1567 = vmatprep.subr.mxu0 0.0
    %1568 = vmatpush2.msra.mxu0 0.0
    %1569 = vmatprep.subr.mxu0 0.0
    %1570 = vmatpush2.msra.mxu0 0.0
    %1571 = vmatprep.subr.mxu0 0.0
    %1572 = vmatpush2.msra.mxu0 0.0
    %1573 = vmatprep.subr.mxu0 0.0
    %1574 = vmatpush2.msra.mxu0 0.0
    %1575 = vmatprep.subr.mxu0 0.0
    %1576 = vmatpush2.msra.mxu0 0.0
    %1577 = vmatprep.subr.mxu0 0.0
    %1578 = vmatpush2.msra.mxu0 0.0
    %1579 = vmatprep.subr.mxu0 0.0
    %1580 = vmatpush2.msra.mxu0 0.0
    %1581 = vmatprep.mubr.f32.mxu0 0.0
    %1582 = vmatmul.mubr.f32.gmra.mxu0 %v1515
    %v1583 = vpop.f32.mrf.mxu0
    %v1584 = vadd.f32 %v149, %v1583
    %v1585 = vpop.f32.mrf.mxu0
    %1586 = vdwg.mxu0
    %1588 = vset.pattern.permute.xlu0 3
    %1589 = vperm.xlu0 %1588, %v1409
    %v1590 = vpop.permute.xlu0 %1589
    %v1592 = vmul.f32 %v1590, %v330
    %v1593 = vadd.f32 %v1584, %v1592
    %v1594 = vxor.u32 %v1593, 2147483648
    %v1595 = vmul.f32 %v1594, 1.442695
    %v1596 = vpow.pop %v1595
    %v1597 = vadd.f32 %v1596, 1.0
    %v1598 = vrcp.pop %v1597
    %v1599 = vmul.f32 1.0, %v1598
    %v1600 = vtanh.pop %v1593
    %v1601 = vmul.f32 %v1599, %v1403
    %1603 = vrot.lane.b32.xlu0 %v1600, 126
    %v1604 = vpop.permute.xlu0 %1603
    %v1606 = vmul.f32 %v1599, %v1604
    %1608 = vrot.lane.b32.xlu0 %v1606, 1
    %v1609 = vpop.permute.xlu0 %1608
    %v1611 = vadd.f32 %v1601, %v1609
    %v1612 = vtanh.pop %v1611
    %1614 = vrot.lane.b32.xlu0 %v1612, 2
    %v1615 = vpop.permute.xlu0 %1614
    %v1617 = vmul.f32 %v1599, %v1615
    %v1618 = vmul.f32 %v1617, %v364
    %v1619 = vadd.f32 %v1618, %v373
    %1621 = vrot.lane.b32.xlu0 %v1619, 3
    %v1622 = vpop.permute.xlu0 %1621
    %vm1624 = vcmask 50224
    %1625 = vst.msk [vmem:[#allocation7] sm:$0x3] %vm1624, %v1622
    %1626 = vmatprep.subr.mxu0 0.0
    %1627 = vmatpush1.msra.mxu0 0.0
    %1628 = vmatprep.subr.mxu0 0.0
    %1629 = vmatpush1.msra.mxu0 0.0
    %1630 = vmatprep.subr.mxu0 0.0
    %1631 = vmatpush1.msra.mxu0 0.0
    %1632 = vmatprep.subr.mxu0 0.0
    %1633 = vmatpush1.msra.mxu0 0.0
    %1634 = vmatprep.subr.mxu0 0.0
    %1635 = vmatpush1.msra.mxu0 0.0
    %1636 = vmatprep.subr.mxu0 0.0
    %1637 = vmatpush1.msra.mxu0 0.0
    %1638 = vmatprep.subr.mxu0 0.0
    %1639 = vmatpush1.msra.mxu0 0.0
    %1640 = vmatprep.subr.mxu0 0.0
    %1641 = vmatpush1.msra.mxu0 0.0
    %1642 = vmatprep.subr.mxu0 0.0
    %1643 = vmatpush1.msra.mxu0 0.0
    %1644 = vmatprep.subr.mxu0 0.0
    %1645 = vmatpush1.msra.mxu0 0.0
    %1646 = vmatprep.subr.mxu0 0.0
    %1647 = vmatpush1.msra.mxu0 0.0
    %1648 = vmatprep.subr.mxu0 0.0
    %1649 = vmatpush1.msra.mxu0 0.0
    %1650 = vmatprep.subr.mxu0 0.0
    %1651 = vmatpush1.msra.mxu0 %v138
    %1652 = vmatprep.subr.mxu0 0.0
    %1653 = vmatpush1.msra.mxu0 %v137
    %1654 = vmatprep.subr.mxu0 0.0
    %1655 = vmatpush1.msra.mxu0 %v136
    %1656 = vmatprep.subr.mxu0 0.0
    %1657 = vmatpush1.msra.mxu0 %v135
    %1658 = vmatprep.subr.mxu0 0.0
    %1659 = vmatpush2.msra.mxu0 0.0
    %1660 = vmatprep.subr.mxu0 0.0
    %1661 = vmatpush2.msra.mxu0 0.0
    %1662 = vmatprep.subr.mxu0 0.0
    %1663 = vmatpush2.msra.mxu0 0.0
    %1664 = vmatprep.subr.mxu0 0.0
    %1665 = vmatpush2.msra.mxu0 0.0
    %1666 = vmatprep.subr.mxu0 0.0
    %1667 = vmatpush2.msra.mxu0 0.0
    %1668 = vmatprep.subr.mxu0 0.0
    %1669 = vmatpush2.msra.mxu0 0.0
    %1670 = vmatprep.subr.mxu0 0.0
    %1671 = vmatpush2.msra.mxu0 0.0
    %1672 = vmatprep.subr.mxu0 0.0
    %1673 = vmatpush2.msra.mxu0 0.0
    %1674 = vmatprep.subr.mxu0 0.0
    %1675 = vmatpush2.msra.mxu0 0.0
    %1676 = vmatprep.subr.mxu0 0.0
    %1677 = vmatpush2.msra.mxu0 0.0
    %1678 = vmatprep.subr.mxu0 0.0
    %1679 = vmatpush2.msra.mxu0 0.0
    %1680 = vmatprep.subr.mxu0 0.0
    %1681 = vmatpush2.msra.mxu0 0.0
    %1682 = vmatprep.subr.mxu0 0.0
    %1683 = vmatpush2.msra.mxu0 0.0
    %1684 = vmatprep.subr.mxu0 0.0
    %1685 = vmatpush2.msra.mxu0 0.0
    %1686 = vmatprep.subr.mxu0 0.0
    %1687 = vmatpush2.msra.mxu0 0.0
    %1688 = vmatprep.subr.mxu0 0.0
    %1689 = vmatpush2.msra.mxu0 0.0
    %1690 = vmatprep.mubr.f32.mxu0 0.0
    %1691 = vmatmul.mubr.f32.gmra.mxu0 %v1515
    %v1692 = vpop.f32.mrf.mxu0
    %v1693 = vadd.f32 %v132, %v1692
    %v1694 = vpop.f32.mrf.mxu0
    %1695 = vdwg.mxu0
    %v1696 = vxor.u32 %v1693, 2147483648
    %v1697 = vmul.f32 %v1696, 1.442695
    %v1698 = vpow.pop %v1697
    %v1699 = vadd.f32 %v1698, 1.0
    %v1700 = vrcp.pop %v1699
    %v1701 = vmul.f32 1.0, %v1700
    %v1702 = vtanh.pop %v1693
    %v1703 = vmul.f32 %v1701, %v1505
    %1705 = vrot.lane.b32.xlu0 %v1702, 64
    %v1706 = vpop.permute.xlu0 %1705
    %v1708 = vmul.f32 %v1701, %v1706
    %1710 = vrot.lane.b32.xlu0 %v1708, 32
    %v1711 = vpop.permute.xlu0 %1710
    %v1713 = vadd.f32 %v1703, %v1711
    %v1714 = vtanh.pop %v1713
    %1716 = vrot.lane.b32.xlu0 %v1714, 64
    %v1717 = vpop.permute.xlu0 %1716
    %v1719 = vmul.f32 %v1701, %v1717
    %1721 = vrot.lane.b32.xlu0 %v1719, 32
    %v1722 = vpop.permute.xlu0 %1721
    %v1723 = vsel %vm153, %v1722, 0
    %1725 = vmatprep.subr.mxu0 0.0
    %1726 = vmatpush1.msra.mxu0 0.0
    %1727 = vmatprep.subr.mxu0 0.0
    %1728 = vmatpush1.msra.mxu0 0.0
    %1729 = vmatprep.subr.mxu0 0.0
    %1730 = vmatpush1.msra.mxu0 0.0
    %1731 = vmatprep.subr.mxu0 0.0
    %1732 = vmatpush1.msra.mxu0 0.0
    %1733 = vmatprep.subr.mxu0 0.0
    %1734 = vmatpush1.msra.mxu0 0.0
    %1735 = vmatprep.subr.mxu0 0.0
    %1736 = vmatpush1.msra.mxu0 0.0
    %1737 = vmatprep.subr.mxu0 0.0
    %1738 = vmatpush1.msra.mxu0 0.0
    %1739 = vmatprep.subr.mxu0 0.0
    %1740 = vmatpush1.msra.mxu0 0.0
    %1741 = vmatprep.subr.mxu0 0.0
    %1742 = vmatpush1.msra.mxu0 0.0
    %1743 = vmatprep.subr.mxu0 0.0
    %1744 = vmatpush1.msra.mxu0 0.0
    %1745 = vmatprep.subr.mxu0 0.0
    %1746 = vmatpush1.msra.mxu0 0.0
    %1747 = vmatprep.subr.mxu0 0.0
    %1748 = vmatpush1.msra.mxu0 0.0
    %1749 = vmatprep.subr.mxu0 0.0
    %1750 = vmatpush1.msra.mxu0 %v142
    %1751 = vmatprep.subr.mxu0 0.0
    %1752 = vmatpush1.msra.mxu0 %v141
    %1753 = vmatprep.subr.mxu0 0.0
    %1754 = vmatpush1.msra.mxu0 %v140
    %1755 = vmatprep.subr.mxu0 0.0
    %1756 = vmatpush1.msra.mxu0 %v139
    %1757 = vmatprep.subr.mxu0 0.0
    %1758 = vmatpush2.msra.mxu0 0.0
    %1759 = vmatprep.subr.mxu0 0.0
    %1760 = vmatpush2.msra.mxu0 0.0
    %1761 = vmatprep.subr.mxu0 0.0
    %1762 = vmatpush2.msra.mxu0 0.0
    %1763 = vmatprep.subr.mxu0 0.0
    %1764 = vmatpush2.msra.mxu0 0.0
    %1765 = vmatprep.subr.mxu0 0.0
    %1766 = vmatpush2.msra.mxu0 0.0
    %1767 = vmatprep.subr.mxu0 0.0
    %1768 = vmatpush2.msra.mxu0 0.0
    %1769 = vmatprep.subr.mxu0 0.0
    %1770 = vmatpush2.msra.mxu0 0.0
    %1771 = vmatprep.subr.mxu0 0.0
    %1772 = vmatpush2.msra.mxu0 0.0
    %1773 = vmatprep.subr.mxu0 0.0
    %1774 = vmatpush2.msra.mxu0 0.0
    %1775 = vmatprep.subr.mxu0 0.0
    %1776 = vmatpush2.msra.mxu0 0.0
    %1777 = vmatprep.subr.mxu0 0.0
    %1778 = vmatpush2.msra.mxu0 0.0
    %1779 = vmatprep.subr.mxu0 0.0
    %1780 = vmatpush2.msra.mxu0 0.0
    %1781 = vmatprep.subr.mxu0 0.0
    %1782 = vmatpush2.msra.mxu0 0.0
    %1783 = vmatprep.subr.mxu0 0.0
    %1784 = vmatpush2.msra.mxu0 0.0
    %1785 = vmatprep.subr.mxu0 0.0
    %1786 = vmatpush2.msra.mxu0 0.0
    %1787 = vmatprep.subr.mxu0 0.0
    %1788 = vmatpush2.msra.mxu0 0.0
    %1789 = vmatprep.mubr.f32.mxu0 0.0
    %1790 = vmatmul.mubr.f32.gmra.mxu0 %v1723
    %v1791 = vpop.f32.mrf.mxu0
    %v1792 = vadd.f32 %v149, %v1791
    %v1793 = vpop.f32.mrf.mxu0
    %1794 = vdwg.mxu0
    %1796 = vset.pattern.permute.xlu0 3
    %1797 = vperm.xlu0 %1796, %v1617
    %v1798 = vpop.permute.xlu0 %1797
    %v1800 = vmul.f32 %v1798, %v330
    %v1801 = vadd.f32 %v1792, %v1800
    %v1802 = vxor.u32 %v1801, 2147483648
    %v1803 = vmul.f32 %v1802, 1.442695
    %v1804 = vpow.pop %v1803
    %v1805 = vadd.f32 %v1804, 1.0
    %v1806 = vrcp.pop %v1805
    %v1807 = vmul.f32 1.0, %v1806
    %v1808 = vtanh.pop %v1801
    %v1809 = vmul.f32 %v1807, %v1611
    %1811 = vrot.lane.b32.xlu0 %v1808, 126
    %v1812 = vpop.permute.xlu0 %1811
    %v1814 = vmul.f32 %v1807, %v1812
    %1816 = vrot.lane.b32.xlu0 %v1814, 1
    %v1817 = vpop.permute.xlu0 %1816
    %v1819 = vadd.f32 %v1809, %v1817
    %v1820 = vtanh.pop %v1819
    %1822 = vrot.lane.b32.xlu0 %v1820, 2
    %v1823 = vpop.permute.xlu0 %1822
    %v1825 = vmul.f32 %v1807, %v1823
    %v1826 = vmul.f32 %v1825, %v364
    %v1827 = vadd.f32 %v1826, %v373
    %1829 = vrot.lane.b32.xlu0 %v1827, 4
    %v1830 = vpop.permute.xlu0 %1829
    %vm1832 = vcmask 58424
    %1833 = vst.msk [vmem:[#allocation7] sm:$0x3] %vm1832, %v1830
    // Predicated region
    $region42: #{tpu_custom_call.1} parent=1 // pred_check
      _
    $region43: #{tpu_custom_call.1} parent=1 // pred_check_branch
      %1835 = sbr.rel (0) target = $region45
    $region44: #{tpu_custom_call.1} parent=1 // pred_region
      %s1837 = ssub.s32 32, 32
      %1838 = vsyncadd [#allocation6], %s1837
      %s1840 = sshll.u32 [#allocation7], 4
      %s1841 = int_to_ptr.vmem [resolvable:$true] %s1840
      %1843 = dma.vmem_to_hbm [thread:$0]  %s1841, 32, %s9, [#allocation6]
    $region45: #{tpu_custom_call.1} parent=1 // pred_fallthru
      _
    // Predicated region
    $region46: #{tpu_custom_call.1} parent=1 // pred_check
      _
    $region47: #{tpu_custom_call.1} parent=1 // pred_check_branch
      %1845 = sbr.rel (0) target = $region49
    $region48: #{tpu_custom_call.1} parent=1 // pred_region
      %1846 = dma.done [#allocation6], 32
    $region49: #{tpu_custom_call.1} parent=1 // pred_fallthru
      _
    %1847 = vsyncpa [#allocation5], 1
    %1848 = vsyncpa [#allocation6], 1

</llo_original>
